<compile_context>
chip_gen: v7x
topology: tpu7x:2x2x1
jax: 0.10.0
libtpu: 0.0.40
codegen_flags: <defaults>
</compile_context>

<pallas_src>
import functools
import math

import jax
import jax.numpy as jnp
import numpy as np
from jax.experimental import pallas as pl
from jax.experimental.pallas import tpu as pltpu

SUBLANE = 8


def _round_up(x, m):
    return ((x + m - 1) // m) * m


def _physical_vmem_bytes():
    """Per-core VMEM capacity; conservative 64 MiB (v7x) fallback."""
    try:
        info = pltpu.get_tpu_info()
        v = int(getattr(info, "vmem_capacity_bytes", 0) or 0)
        if v > 0:
            return v
    except Exception:
        pass
    return 64 * 1024 * 1024


# ---------------------------------------------------------------------------
# Fused kernel: all Linear+activation layers for one batch tile.
# Refs: x_ref, w0, b0, w1, b1, ..., w_{L-1}, b_{L-1}, enc_ref, rec_ref
# ---------------------------------------------------------------------------
def _dae_fused_kernel(x_ref, *refs, n_layers, n_enc, compute_dtype):
    wb_refs = refs[: 2 * n_layers]
    enc_ref = refs[2 * n_layers]
    rec_ref = refs[2 * n_layers + 1]

    h = x_ref[...]                                   # bf16 batch tile
    for li in range(n_layers):
        w_ref = wb_refs[2 * li]
        b_ref = wb_refs[2 * li + 1]
        # MXU matmul on bf16 operands, f32 accumulation.
        y = jnp.dot(h.astype(compute_dtype), w_ref[...].astype(compute_dtype),
                    preferred_element_type=jnp.float32)
        y = y + b_ref[...]                           # f32 epilogue (v5e-safe)
        if li == n_layers - 1:
            h = jax.nn.sigmoid(y)                    # final decoder layer
        else:
            h = jnp.maximum(y, 0.0)                  # ReLU everywhere else
        if li == n_enc - 1:
            enc_ref[...] = h.astype(enc_ref.dtype)
    rec_ref[...] = h.astype(rec_ref.dtype)


# ---------------------------------------------------------------------------
# Parameters: PyTorch-default-like init (logical, f32) + bf16 weight packing.
# ---------------------------------------------------------------------------
def init_dae_params(key, layers):
    """U(-1/sqrt(fan_in), 1/sqrt(fan_in)) for weight and bias (PyTorch default).
    Returns ([(w, b), ...] in forward order, n_encoder_layers)."""
    nlayers = len(layers)
    dims = [(layers[i], layers[i + 1]) for i in range(nlayers - 1)]            # encoder
    dims += [(layers[i], layers[i - 1]) for i in range(nlayers - 1, 1, -1)]    # decoder (ReLU)
    dims += [(layers[1], layers[0])]                                           # decoder (Sigmoid)
    n_enc = nlayers - 1

    params = []
    for (din, dout) in dims:
        key, kw, kb = jax.random.split(key, 3)
        bound = 1.0 / math.sqrt(din)
        w = jax.random.uniform(kw, (din, dout), jnp.float32, -bound, bound)
        b = jax.random.uniform(kb, (dout,), jnp.float32, -bound, bound)
        params.append((w, b))
    return params, n_enc


def pack_params(params, param_dtype=jnp.bfloat16):
    """No feature padding (full-extent BlockSpec blocks). Weights pre-cast to
    bf16 for the MXU; biases kept f32 as (1, dout) rows for the f32 epilogue."""
    return [(w.astype(param_dtype), b.reshape(1, -1).astype(jnp.float32))
            for (w, b) in params]


# ---------------------------------------------------------------------------
# Forward pass: one fused pallas_call, grid over the batch only.
# ---------------------------------------------------------------------------
def dae_forward(packed_params, n_enc, layers, X, target_tile_b=1024):
    """Returns (encoded, recon) matching DAE.forward."""
    B, in_features = X.shape
    assert in_features == layers[0]
    n_layers = len(packed_params)
    enc_dim = layers[-1]
    out_dtype = X.dtype
    io_dtype = jnp.bfloat16

    # bf16 input DMA halves input HBM traffic (matmul is bf16 anyway).
    Xk = X if X.dtype == io_dtype else X.astype(io_dtype)
    # Batch padding only when B is not sublane-aligned (rare, tiny copy);
    # ragged last tile vs. tile_b is handled by Pallas OOB-block semantics.
    if B % SUBLANE != 0:
        Xk = jnp.pad(Xk, ((0, _round_up(B, SUBLANE) - B), (0, 0)))
    Bp = Xk.shape[0]

    # ---- VMEM accounting (honest): resident weights + double-buffered I/O
    # tiles + ~3 live f32 intermediates + one bf16 cast copy per tile row.
    weights_bytes = sum(w.size * w.dtype.itemsize + b.size * b.dtype.itemsize
                        for (w, b) in packed_params)
    max_dim = max(max(layers), in_features)
    in_b = np.dtype(io_dtype).itemsize
    out_b = np.dtype(out_dtype).itemsize
    per_row = (2 * in_features * in_b          # X tile, double-buffered
               + 2 * enc_dim * out_b           # encoded tile, double-buffered
               + 2 * in_features * out_b       # recon tile, double-buffered
               + (3 * 4 + 2) * max_dim)        # f32 intermediates + bf16 copy

    phys_vmem = _physical_vmem_bytes()
    vmem_budget = min(int(phys_vmem * 0.75), 96 * 1024 * 1024)
    # Conservatively assume weights may end up double-buffered (fallback path).
    avail = vmem_budget - 2 * weights_bytes
    if avail < SUBLANE * per_row:
        # TODO(synk): weight-streaming variant (second grid axis over layers)
        # for models whose packed weights alone exceed the VMEM budget.
        raise ValueError(
            f"DAE weights ({weights_bytes / 2**20:.1f} MiB, x2 buffers) leave no "
            f"room for activation tiles within the {vmem_budget / 2**20:.0f} MiB "
            "VMEM budget; a weight-streaming kernel is required for this size.")

    tile_b = min(target_tile_b, avail // per_row)
    if B >= 2 * SUBLANE:
        tile_b = min(tile_b, -(-B // 2))       # >= 2 grid steps -> both v7x TCs
    tile_b = min(tile_b, Bp)
    align = 256 if tile_b >= 256 else (128 if tile_b >= 128 else SUBLANE)
    tile_b = max(SUBLANE, (tile_b // align) * align)
    grid = (pl.cdiv(Bp, tile_b),)

    # Explicit scoped-VMEM limit derived from the same budget math (+headroom).
    footprint = 2 * weights_bytes + tile_b * per_row
    vmem_limit = int(min(max(footprint * 1.25 + (4 << 20), 16 << 20), phys_vmem))

    # Advisory cost estimate so XLA schedules neighbors around the kernel.
    flops = 2 * Bp * sum(w.shape[0] * w.shape[1] for (w, _) in packed_params)
    cost = pl.CostEstimate(
        flops=int(flops),
        transcendentals=int(Bp * in_features),          # final sigmoid
        bytes_accessed=int(Xk.size * in_b + weights_bytes
                           + Bp * (enc_dim + in_features) * out_b))

    out_shape = (jax.ShapeDtypeStruct((Bp, enc_dim), out_dtype),
                 jax.ShapeDtypeStruct((Bp, in_features), out_dtype))
    kernel = functools.partial(_dae_fused_kernel, n_layers=n_layers,
                               n_enc=n_enc, compute_dtype=jnp.bfloat16)

    def build(single_buffer_weights):
        in_specs = [pl.BlockSpec((tile_b, in_features), lambda i: (i, 0))]
        for (w, b) in packed_params:
            extra = ({"pipeline_mode": pl.Buffered(1)}
                     if single_buffer_weights else {})
            in_specs.append(pl.BlockSpec(w.shape, lambda i: (0, 0), **extra))
            in_specs.append(pl.BlockSpec(b.shape, lambda i: (0, 0), **extra))
        out_specs = (pl.BlockSpec((tile_b, enc_dim), lambda i: (i, 0)),
                     pl.BlockSpec((tile_b, in_features), lambda i: (i, 0)))
        return pl.pallas_call(
            kernel,
            out_shape=out_shape,
            grid=grid,
            in_specs=in_specs,
            out_specs=out_specs,
            cost_estimate=cost,
            compiler_params=pltpu.CompilerParams(
                dimension_semantics=("parallel",),
                vmem_limit_bytes=vmem_limit),
        )

    flat_args = [Xk] + [a for wb in packed_params for a in wb]
    try:
        # Grid-invariant weights -> single VMEM buffer (halves weight footprint).
        enc_p, rec_p = build(True)(*flat_args)
    except Exception:
        # Fallback: default (double-buffered) pipelining if Buffered(1) rejected.
        enc_p, rec_p = build(False)(*flat_args)

    if Bp != B:
        enc_p, rec_p = enc_p[:B], rec_p[:B]
    return enc_p, rec_p


# Pure-JAX f32 reference for verification.
def dae_forward_ref(params, n_enc, X):
    h = X
    encoded = None
    for li, (w, b) in enumerate(params):
        y = h @ w + b
        h = jax.nn.sigmoid(y) if li == len(params) - 1 else jnp.maximum(y, 0.0)
        if li == n_enc - 1:
            encoded = h
    return encoded, h


if __name__ == "__main__":
    # Small shapes consistent with the module: layers = [in, h1, bottleneck]
    layers = [16, 32, 8]      # in_features=16, encoded dim=8
    batch = 64                # large enough that the grid has >= 2 batch tiles

    key = jax.random.PRNGKey(0)
    key, kx = jax.random.split(key)
    X = jax.random.uniform(kx, (batch, layers[0]), jnp.float32)

    params_f32, n_enc = init_dae_params(key, layers)
    params_packed = pack_params(params_f32)

    encoded, recon = dae_forward(params_packed, n_enc, layers, X)
    jax.block_until_ready((encoded, recon))

    # sanity check vs pure-JAX f32 reference (bf16 I/O + MXU -> loose tolerances)
    enc_ref, rec_ref = dae_forward_ref(params_f32, n_enc, X)
    assert encoded.shape == (batch, layers[-1])
    assert recon.shape == (batch, layers[0])
    np.testing.assert_allclose(np.asarray(encoded), np.asarray(enc_ref),
                               rtol=5e-2, atol=5e-2)
    np.testing.assert_allclose(np.asarray(recon), np.asarray(rec_ref),
                               rtol=5e-2, atol=5e-2)

    # TODO(synk): the fit() training loop (dropout-noise + SGD/momentum + MSE)
    # is host-side training logic, not part of the forward pass; not kernelized.
    print("KERNEL_OK")
</pallas_src>

<mosaic_0001>
module attributes {stable_mosaic.version = 11 : i64} {
  func.func @_dae_fused_kernel(%arg0: i32, %arg1: memref<32x16xbf16, #tpu.memory_space<vmem>>, %arg2: memref<16x32xbf16, #tpu.memory_space<vmem>>, %arg3: memref<1x32xf32, #tpu.memory_space<vmem>>, %arg4: memref<32x8xbf16, #tpu.memory_space<vmem>>, %arg5: memref<1x8xf32, #tpu.memory_space<vmem>>, %arg6: memref<8x32xbf16, #tpu.memory_space<vmem>>, %arg7: memref<1x32xf32, #tpu.memory_space<vmem>>, %arg8: memref<32x16xbf16, #tpu.memory_space<vmem>>, %arg9: memref<1x16xf32, #tpu.memory_space<vmem>>, %arg10: memref<32x8xf32, #tpu.memory_space<vmem>>, %arg11: memref<32x16xf32, #tpu.memory_space<vmem>>) attributes {dimension_semantics = [#tpu.dimension_semantics<parallel>], iteration_bounds = array<i64: 2>, scalar_prefetch = 0 : i64, scratch_operands = 0 : i64, tpu.core_type = #tpu.core_type<tc>, window_params = [{transform_indices = @transform_0, window_bounds = array<i64: 32, 16>}, {pipeline_mode = #tpu.pipeline_mode<synchronous>, transform_indices = @transform_1, window_bounds = array<i64: 16, 32>}, {pipeline_mode = #tpu.pipeline_mode<synchronous>, transform_indices = @transform_2, window_bounds = array<i64: 1, 32>}, {pipeline_mode = #tpu.pipeline_mode<synchronous>, transform_indices = @transform_3, window_bounds = array<i64: 32, 8>}, {pipeline_mode = #tpu.pipeline_mode<synchronous>, transform_indices = @transform_4, window_bounds = array<i64: 1, 8>}, {pipeline_mode = #tpu.pipeline_mode<synchronous>, transform_indices = @transform_5, window_bounds = array<i64: 8, 32>}, {pipeline_mode = #tpu.pipeline_mode<synchronous>, transform_indices = @transform_6, window_bounds = array<i64: 1, 32>}, {pipeline_mode = #tpu.pipeline_mode<synchronous>, transform_indices = @transform_7, window_bounds = array<i64: 32, 16>}, {pipeline_mode = #tpu.pipeline_mode<synchronous>, transform_indices = @transform_8, window_bounds = array<i64: 1, 16>}, {transform_indices = @transform_9, window_bounds = array<i64: 32, 8>}, {transform_indices = @transform_10, window_bounds = array<i64: 32, 16>}]} {
    %c0 = arith.constant 0 : index
    %c0_0 = arith.constant 0 : index
    %0 = vector.load %arg1[%c0, %c0_0] : memref<32x16xbf16, #tpu.memory_space<vmem>>, vector<32x16xbf16>
    %c0_1 = arith.constant 0 : index
    %c0_2 = arith.constant 0 : index
    %1 = vector.load %arg2[%c0_1, %c0_2] : memref<16x32xbf16, #tpu.memory_space<vmem>>, vector<16x32xbf16>
    %cst = arith.constant dense<0.000000e+00> : vector<32x32xf32>
    %2 = tpu.matmul %0, %1, %cst {dimension_numbers = #tpu.dot_dimension_numbers<[1], [0], [0], [1], [0, 0, 1, 1], [], []>} : vector<32x16xbf16>, vector<16x32xbf16>, vector<32x32xf32> -> vector<32x32xf32>
    %c0_3 = arith.constant 0 : index
    %c0_4 = arith.constant 0 : index
    %3 = vector.load %arg3[%c0_3, %c0_4] : memref<1x32xf32, #tpu.memory_space<vmem>>, vector<1x32xf32>
    %4 = vector.broadcast %3 : vector<1x32xf32> to vector<32x32xf32>
    %5 = arith.addf %2, %4 : vector<32x32xf32>
    %cst_5 = arith.constant 0.000000e+00 : f32
    %6 = vector.broadcast %cst_5 : f32 to vector<32x32xf32>
    %7 = arith.maximumf %5, %6 : vector<32x32xf32>
    %8 = arith.truncf %7 : vector<32x32xf32> to vector<32x32xbf16>
    %c0_6 = arith.constant 0 : index
    %c0_7 = arith.constant 0 : index
    %9 = vector.load %arg4[%c0_6, %c0_7] : memref<32x8xbf16, #tpu.memory_space<vmem>>, vector<32x8xbf16>
    %cst_8 = arith.constant dense<0.000000e+00> : vector<32x8xf32>
    %10 = tpu.matmul %8, %9, %cst_8 {dimension_numbers = #tpu.dot_dimension_numbers<[1], [0], [0], [1], [0, 0, 1, 1], [], []>} : vector<32x32xbf16>, vector<32x8xbf16>, vector<32x8xf32> -> vector<32x8xf32>
    %c0_9 = arith.constant 0 : index
    %c0_10 = arith.constant 0 : index
    %11 = vector.load %arg5[%c0_9, %c0_10] : memref<1x8xf32, #tpu.memory_space<vmem>>, vector<1x8xf32>
    %12 = vector.broadcast %11 : vector<1x8xf32> to vector<32x8xf32>
    %13 = arith.addf %10, %12 : vector<32x8xf32>
    %cst_11 = arith.constant 0.000000e+00 : f32
    %14 = vector.broadcast %cst_11 : f32 to vector<32x8xf32>
    %15 = arith.maximumf %13, %14 : vector<32x8xf32>
    %c0_12 = arith.constant 0 : index
    %c0_13 = arith.constant 0 : index
    %16 = vector.load %arg10[%c0_12, %c0_13] : memref<32x8xf32, #tpu.memory_space<vmem>>, vector<32x8xf32>
    tpu.vector_store %arg10[%c0_12, %c0_13], %15 {strides = array<i32>} : memref<32x8xf32, #tpu.memory_space<vmem>>, vector<32x8xf32>,
    %17 = arith.truncf %15 : vector<32x8xf32> to vector<32x8xbf16>
    %c0_14 = arith.constant 0 : index
    %c0_15 = arith.constant 0 : index
    %18 = vector.load %arg6[%c0_14, %c0_15] : memref<8x32xbf16, #tpu.memory_space<vmem>>, vector<8x32xbf16>
    %cst_16 = arith.constant dense<0.000000e+00> : vector<32x32xf32>
    %19 = tpu.matmul %17, %18, %cst_16 {dimension_numbers = #tpu.dot_dimension_numbers<[1], [0], [0], [1], [0, 0, 1, 1], [], []>} : vector<32x8xbf16>, vector<8x32xbf16>, vector<32x32xf32> -> vector<32x32xf32>
    %c0_17 = arith.constant 0 : index
    %c0_18 = arith.constant 0 : index
    %20 = vector.load %arg7[%c0_17, %c0_18] : memref<1x32xf32, #tpu.memory_space<vmem>>, vector<1x32xf32>
    %21 = vector.broadcast %20 : vector<1x32xf32> to vector<32x32xf32>
    %22 = arith.addf %19, %21 : vector<32x32xf32>
    %cst_19 = arith.constant 0.000000e+00 : f32
    %23 = vector.broadcast %cst_19 : f32 to vector<32x32xf32>
    %24 = arith.maximumf %22, %23 : vector<32x32xf32>
    %25 = arith.truncf %24 : vector<32x32xf32> to vector<32x32xbf16>
    %c0_20 = arith.constant 0 : index
    %c0_21 = arith.constant 0 : index
    %26 = vector.load %arg8[%c0_20, %c0_21] : memref<32x16xbf16, #tpu.memory_space<vmem>>, vector<32x16xbf16>
    %cst_22 = arith.constant dense<0.000000e+00> : vector<32x16xf32>
    %27 = tpu.matmul %25, %26, %cst_22 {dimension_numbers = #tpu.dot_dimension_numbers<[1], [0], [0], [1], [0, 0, 1, 1], [], []>} : vector<32x32xbf16>, vector<32x16xbf16>, vector<32x16xf32> -> vector<32x16xf32>
    %c0_23 = arith.constant 0 : index
    %c0_24 = arith.constant 0 : index
    %28 = vector.load %arg9[%c0_23, %c0_24] : memref<1x16xf32, #tpu.memory_space<vmem>>, vector<1x16xf32>
    %29 = vector.broadcast %28 : vector<1x16xf32> to vector<32x16xf32>
    %30 = arith.addf %27, %29 : vector<32x16xf32>
    %31 = arith.negf %30 : vector<32x16xf32>
    %32 = math.exp %31 : vector<32x16xf32>
    %cst_25 = arith.constant 1.000000e+00 : f32
    %33 = vector.broadcast %cst_25 : f32 to vector<32x16xf32>
    %34 = arith.addf %33, %32 : vector<32x16xf32>
    %35 = arith.divf %33, %34 : vector<32x16xf32>
    %c0_26 = arith.constant 0 : index
    %c0_27 = arith.constant 0 : index
    %36 = vector.load %arg11[%c0_26, %c0_27] : memref<32x16xf32, #tpu.memory_space<vmem>>, vector<32x16xf32>
    tpu.vector_store %arg11[%c0_26, %c0_27], %35 {strides = array<i32>} : memref<32x16xf32, #tpu.memory_space<vmem>>, vector<32x16xf32>,
    return
  }
  func.func @transform_0(%arg0: i32) -> (i32, i32) {
    %c0_i32 = arith.constant 0 : i32
    %c0_i32_0 = arith.constant 0 : i32
    return %arg0, %c0_i32 : i32, i32
  }
  func.func @transform_1(%arg0: i32) -> (i32, i32) {
    %c0_i32 = arith.constant 0 : i32
    %c0_i32_0 = arith.constant 0 : i32
    %c0_i32_1 = arith.constant 0 : i32
    return %c0_i32, %c0_i32_0 : i32, i32
  }
  func.func @transform_2(%arg0: i32) -> (i32, i32) {
    %c0_i32 = arith.constant 0 : i32
    %c0_i32_0 = arith.constant 0 : i32
    %c0_i32_1 = arith.constant 0 : i32
    return %c0_i32, %c0_i32_0 : i32, i32
  }
  func.func @transform_3(%arg0: i32) -> (i32, i32) {
    %c0_i32 = arith.constant 0 : i32
    %c0_i32_0 = arith.constant 0 : i32
    %c0_i32_1 = arith.constant 0 : i32
    return %c0_i32, %c0_i32_0 : i32, i32
  }
  func.func @transform_4(%arg0: i32) -> (i32, i32) {
    %c0_i32 = arith.constant 0 : i32
    %c0_i32_0 = arith.constant 0 : i32
    %c0_i32_1 = arith.constant 0 : i32
    return %c0_i32, %c0_i32_0 : i32, i32
  }
  func.func @transform_5(%arg0: i32) -> (i32, i32) {
    %c0_i32 = arith.constant 0 : i32
    %c0_i32_0 = arith.constant 0 : i32
    %c0_i32_1 = arith.constant 0 : i32
    return %c0_i32, %c0_i32_0 : i32, i32
  }
  func.func @transform_6(%arg0: i32) -> (i32, i32) {
    %c0_i32 = arith.constant 0 : i32
    %c0_i32_0 = arith.constant 0 : i32
    %c0_i32_1 = arith.constant 0 : i32
    return %c0_i32, %c0_i32_0 : i32, i32
  }
  func.func @transform_7(%arg0: i32) -> (i32, i32) {
    %c0_i32 = arith.constant 0 : i32
    %c0_i32_0 = arith.constant 0 : i32
    %c0_i32_1 = arith.constant 0 : i32
    return %c0_i32, %c0_i32_0 : i32, i32
  }
  func.func @transform_8(%arg0: i32) -> (i32, i32) {
    %c0_i32 = arith.constant 0 : i32
    %c0_i32_0 = arith.constant 0 : i32
    %c0_i32_1 = arith.constant 0 : i32
    return %c0_i32, %c0_i32_0 : i32, i32
  }
  func.func @transform_9(%arg0: i32) -> (i32, i32) {
    %c0_i32 = arith.constant 0 : i32
    %c0_i32_0 = arith.constant 0 : i32
    return %arg0, %c0_i32 : i32, i32
  }
  func.func @transform_10(%arg0: i32) -> (i32, i32) {
    %c0_i32 = arith.constant 0 : i32
    %c0_i32_0 = arith.constant 0 : i32
    return %arg0, %c0_i32 : i32, i32
  }
}

module attributes {stable_mosaic.version = 11 : i64} {
  func.func @_dae_fused_kernel(%arg0: i32, %arg1: memref<32x16xbf16, #tpu.memory_space<vmem>>, %arg2: memref<16x32xbf16, #tpu.memory_space<vmem>>, %arg3: memref<1x32xf32, #tpu.memory_space<vmem>>, %arg4: memref<32x8xbf16, #tpu.memory_space<vmem>>, %arg5: memref<1x8xf32, #tpu.memory_space<vmem>>, %arg6: memref<8x32xbf16, #tpu.memory_space<vmem>>, %arg7: memref<1x32xf32, #tpu.memory_space<vmem>>, %arg8: memref<32x16xbf16, #tpu.memory_space<vmem>>, %arg9: memref<1x16xf32, #tpu.memory_space<vmem>>, %arg10: memref<32x8xf32, #tpu.memory_space<vmem>>, %arg11: memref<32x16xf32, #tpu.memory_space<vmem>>) attributes {dimension_semantics = [#tpu.dimension_semantics<parallel>], iteration_bounds = array<i64: 2>, scalar_prefetch = 0 : i64, scratch_operands = 0 : i64, tpu.core_type = #tpu.core_type<tc>, window_params = [{transform_indices = @transform_0, window_bounds = array<i64: 32, 16>}, {pipeline_mode = #tpu.pipeline_mode<synchronous>, transform_indices = @transform_1, window_bounds = array<i64: 16, 32>}, {pipeline_mode = #tpu.pipeline_mode<synchronous>, transform_indices = @transform_2, window_bounds = array<i64: 1, 32>}, {pipeline_mode = #tpu.pipeline_mode<synchronous>, transform_indices = @transform_3, window_bounds = array<i64: 32, 8>}, {pipeline_mode = #tpu.pipeline_mode<synchronous>, transform_indices = @transform_4, window_bounds = array<i64: 1, 8>}, {pipeline_mode = #tpu.pipeline_mode<synchronous>, transform_indices = @transform_5, window_bounds = array<i64: 8, 32>}, {pipeline_mode = #tpu.pipeline_mode<synchronous>, transform_indices = @transform_6, window_bounds = array<i64: 1, 32>}, {pipeline_mode = #tpu.pipeline_mode<synchronous>, transform_indices = @transform_7, window_bounds = array<i64: 32, 16>}, {pipeline_mode = #tpu.pipeline_mode<synchronous>, transform_indices = @transform_8, window_bounds = array<i64: 1, 16>}, {transform_indices = @transform_9, window_bounds = array<i64: 32, 8>}, {transform_indices = @transform_10, window_bounds = array<i64: 32, 16>}]} {
    %c0 = arith.constant 0 : index
    %c0_0 = arith.constant 0 : index
    %0 = vector.load %arg1[%c0, %c0_0] : memref<32x16xbf16, #tpu.memory_space<vmem>>, vector<32x16xbf16>
    %c0_1 = arith.constant 0 : index
    %c0_2 = arith.constant 0 : index
    %1 = vector.load %arg2[%c0_1, %c0_2] : memref<16x32xbf16, #tpu.memory_space<vmem>>, vector<16x32xbf16>
    %cst = arith.constant dense<0.000000e+00> : vector<32x32xf32>
    %2 = tpu.matmul %0, %1, %cst {dimension_numbers = #tpu.dot_dimension_numbers<[1], [0], [0], [1], [0, 0, 1, 1], [], []>} : vector<32x16xbf16>, vector<16x32xbf16>, vector<32x32xf32> -> vector<32x32xf32>
    %c0_3 = arith.constant 0 : index
    %c0_4 = arith.constant 0 : index
    %3 = vector.load %arg3[%c0_3, %c0_4] : memref<1x32xf32, #tpu.memory_space<vmem>>, vector<1x32xf32>
    %4 = vector.broadcast %3 : vector<1x32xf32> to vector<32x32xf32>
    %5 = arith.addf %2, %4 : vector<32x32xf32>
    %cst_5 = arith.constant 0.000000e+00 : f32
    %6 = vector.broadcast %cst_5 : f32 to vector<32x32xf32>
    %7 = arith.maximumf %5, %6 : vector<32x32xf32>
    %8 = arith.truncf %7 : vector<32x32xf32> to vector<32x32xbf16>
    %c0_6 = arith.constant 0 : index
    %c0_7 = arith.constant 0 : index
    %9 = vector.load %arg4[%c0_6, %c0_7] : memref<32x8xbf16, #tpu.memory_space<vmem>>, vector<32x8xbf16>
    %cst_8 = arith.constant dense<0.000000e+00> : vector<32x8xf32>
    %10 = tpu.matmul %8, %9, %cst_8 {dimension_numbers = #tpu.dot_dimension_numbers<[1], [0], [0], [1], [0, 0, 1, 1], [], []>} : vector<32x32xbf16>, vector<32x8xbf16>, vector<32x8xf32> -> vector<32x8xf32>
    %c0_9 = arith.constant 0 : index
    %c0_10 = arith.constant 0 : index
    %11 = vector.load %arg5[%c0_9, %c0_10] : memref<1x8xf32, #tpu.memory_space<vmem>>, vector<1x8xf32>
    %12 = vector.broadcast %11 : vector<1x8xf32> to vector<32x8xf32>
    %13 = arith.addf %10, %12 : vector<32x8xf32>
    %cst_11 = arith.constant 0.000000e+00 : f32
    %14 = vector.broadcast %cst_11 : f32 to vector<32x8xf32>
    %15 = arith.maximumf %13, %14 : vector<32x8xf32>
    %c0_12 = arith.constant 0 : index
    %c0_13 = arith.constant 0 : index
    %16 = vector.load %arg10[%c0_12, %c0_13] : memref<32x8xf32, #tpu.memory_space<vmem>>, vector<32x8xf32>
    tpu.vector_store %arg10[%c0_12, %c0_13], %15 {strides = array<i32>} : memref<32x8xf32, #tpu.memory_space<vmem>>, vector<32x8xf32>,
    %17 = arith.truncf %15 : vector<32x8xf32> to vector<32x8xbf16>
    %c0_14 = arith.constant 0 : index
    %c0_15 = arith.constant 0 : index
    %18 = vector.load %arg6[%c0_14, %c0_15] : memref<8x32xbf16, #tpu.memory_space<vmem>>, vector<8x32xbf16>
    %cst_16 = arith.constant dense<0.000000e+00> : vector<32x32xf32>
    %19 = tpu.matmul %17, %18, %cst_16 {dimension_numbers = #tpu.dot_dimension_numbers<[1], [0], [0], [1], [0, 0, 1, 1], [], []>} : vector<32x8xbf16>, vector<8x32xbf16>, vector<32x32xf32> -> vector<32x32xf32>
    %c0_17 = arith.constant 0 : index
    %c0_18 = arith.constant 0 : index
    %20 = vector.load %arg7[%c0_17, %c0_18] : memref<1x32xf32, #tpu.memory_space<vmem>>, vector<1x32xf32>
    %21 = vector.broadcast %20 : vector<1x32xf32> to vector<32x32xf32>
    %22 = arith.addf %19, %21 : vector<32x32xf32>
    %cst_19 = arith.constant 0.000000e+00 : f32
    %23 = vector.broadcast %cst_19 : f32 to vector<32x32xf32>
    %24 = arith.maximumf %22, %23 : vector<32x32xf32>
    %25 = arith.truncf %24 : vector<32x32xf32> to vector<32x32xbf16>
    %c0_20 = arith.constant 0 : index
    %c0_21 = arith.constant 0 : index
    %26 = vector.load %arg8[%c0_20, %c0_21] : memref<32x16xbf16, #tpu.memory_space<vmem>>, vector<32x16xbf16>
    %cst_22 = arith.constant dense<0.000000e+00> : vector<32x16xf32>
    %27 = tpu.matmul %25, %26, %cst_22 {dimension_numbers = #tpu.dot_dimension_numbers<[1], [0], [0], [1], [0, 0, 1, 1], [], []>} : vector<32x32xbf16>, vector<32x16xbf16>, vector<32x16xf32> -> vector<32x16xf32>
    %c0_23 = arith.constant 0 : index
    %c0_24 = arith.constant 0 : index
    %28 = vector.load %arg9[%c0_23, %c0_24] : memref<1x16xf32, #tpu.memory_space<vmem>>, vector<1x16xf32>
    %29 = vector.broadcast %28 : vector<1x16xf32> to vector<32x16xf32>
    %30 = arith.addf %27, %29 : vector<32x16xf32>
    %31 = arith.negf %30 : vector<32x16xf32>
    %32 = math.exp %31 : vector<32x16xf32>
    %cst_25 = arith.constant 1.000000e+00 : f32
    %33 = vector.broadcast %cst_25 : f32 to vector<32x16xf32>
    %34 = arith.addf %33, %32 : vector<32x16xf32>
    %35 = arith.divf %33, %34 : vector<32x16xf32>
    %c0_26 = arith.constant 0 : index
    %c0_27 = arith.constant 0 : index
    %36 = vector.load %arg11[%c0_26, %c0_27] : memref<32x16xf32, #tpu.memory_space<vmem>>, vector<32x16xf32>
    tpu.vector_store %arg11[%c0_26, %c0_27], %35 {strides = array<i32>} : memref<32x16xf32, #tpu.memory_space<vmem>>, vector<32x16xf32>,
    return
  }
  func.func @transform_0(%arg0: i32) -> (i32, i32) {
    %c0_i32 = arith.constant 0 : i32
    %c0_i32_0 = arith.constant 0 : i32
    return %arg0, %c0_i32 : i32, i32
  }
  func.func @transform_1(%arg0: i32) -> (i32, i32) {
    %c0_i32 = arith.constant 0 : i32
    %c0_i32_0 = arith.constant 0 : i32
    %c0_i32_1 = arith.constant 0 : i32
    return %c0_i32, %c0_i32_0 : i32, i32
  }
  func.func @transform_2(%arg0: i32) -> (i32, i32) {
    %c0_i32 = arith.constant 0 : i32
    %c0_i32_0 = arith.constant 0 : i32
    %c0_i32_1 = arith.constant 0 : i32
    return %c0_i32, %c0_i32_0 : i32, i32
  }
  func.func @transform_3(%arg0: i32) -> (i32, i32) {
    %c0_i32 = arith.constant 0 : i32
    %c0_i32_0 = arith.constant 0 : i32
    %c0_i32_1 = arith.constant 0 : i32
    return %c0_i32, %c0_i32_0 : i32, i32
  }
  func.func @transform_4(%arg0: i32) -> (i32, i32) {
    %c0_i32 = arith.constant 0 : i32
    %c0_i32_0 = arith.constant 0 : i32
    %c0_i32_1 = arith.constant 0 : i32
    return %c0_i32, %c0_i32_0 : i32, i32
  }
  func.func @transform_5(%arg0: i32) -> (i32, i32) {
    %c0_i32 = arith.constant 0 : i32
    %c0_i32_0 = arith.constant 0 : i32
    %c0_i32_1 = arith.constant 0 : i32
    return %c0_i32, %c0_i32_0 : i32, i32
  }
  func.func @transform_6(%arg0: i32) -> (i32, i32) {
    %c0_i32 = arith.constant 0 : i32
    %c0_i32_0 = arith.constant 0 : i32
    %c0_i32_1 = arith.constant 0 : i32
    return %c0_i32, %c0_i32_0 : i32, i32
  }
  func.func @transform_7(%arg0: i32) -> (i32, i32) {
    %c0_i32 = arith.constant 0 : i32
    %c0_i32_0 = arith.constant 0 : i32
    %c0_i32_1 = arith.constant 0 : i32
    return %c0_i32, %c0_i32_0 : i32, i32
  }
  func.func @transform_8(%arg0: i32) -> (i32, i32) {
    %c0_i32 = arith.constant 0 : i32
    %c0_i32_0 = arith.constant 0 : i32
    %c0_i32_1 = arith.constant 0 : i32
    return %c0_i32, %c0_i32_0 : i32, i32
  }
  func.func @transform_9(%arg0: i32) -> (i32, i32) {
    %c0_i32 = arith.constant 0 : i32
    %c0_i32_0 = arith.constant 0 : i32
    return %arg0, %c0_i32 : i32, i32
  }
  func.func @transform_10(%arg0: i32) -> (i32, i32) {
    %c0_i32 = arith.constant 0 : i32
    %c0_i32_0 = arith.constant 0 : i32
    return %arg0, %c0_i32 : i32, i32
  }
}

</mosaic_0001>

<llo_original>
// kernel: tpu_custom_call.1
$region0: #{tpu_custom_call.1}
  #allocation0 [shape = 'u32[]', space=smem, size = 0x4, offset = 0x4, fixed_abs, tag = 'smem constant byte address 0x4 - core index']
  #allocation1 [shape = 'u32[144,128]{1,0:T(1,128)}', space=vmem, size = 0x12000, scoped, tag = 'internal scratch']
  %s0 = inlined_call_operand.vmem [shape: bf16[64,16], index: 0, kind: input, shape index: {}]
  %s1 = inlined_call_operand.vmem [shape: bf16[16,32], index: 1, kind: input, shape index: {}]
  %s2 = inlined_call_operand.vmem [shape: f32[1,32], index: 2, kind: input, shape index: {}]
  %s3 = inlined_call_operand.vmem [shape: bf16[32,8], index: 3, kind: input, shape index: {}]
  %s4 = inlined_call_operand.vmem [shape: f32[1,8], index: 4, kind: input, shape index: {}]
  %s5 = inlined_call_operand.vmem [shape: bf16[8,32], index: 5, kind: input, shape index: {}]
  %s6 = inlined_call_operand.vmem [shape: f32[1,32], index: 6, kind: input, shape index: {}]
  %s7 = inlined_call_operand.vmem [shape: bf16[32,16], index: 7, kind: input, shape index: {}]
  %s8 = inlined_call_operand.vmem [shape: f32[1,16], index: 8, kind: input, shape index: {}]
  %s9 = inlined_call_operand.vmem [shape: f32[64,8], index: 9, kind: output, shape index: {0}]
  %s10 = inlined_call_operand.vmem [shape: f32[64,16], index: 10, kind: output, shape index: {1}]
  %11 = xla_tuple %s9, %s10
  %s12 = sld [smem:[#allocation0]]
  $region77: #{tpu_custom_call.1} parent=0
    _
  %s14 = ssub.s32 1, %s12
  %s15 = scalar_select 0, %s14, %s12
  loop: start=0, step=1, limit=4
  $region2: #{tpu_custom_call.1} parent=0 // loop_pre_header
    _
  $region3: #{tpu_custom_call.1} parent=0 // loop_header
    %s17 = sphi 0, %s21
    %p18 = scmp.ge.s32.totalorder %s17, 4
    %s27 = sphi 0, %s29
    %s30 = sphi 0, %s27
    %s31 = sphi 0, %s30
    %s47 = sphi 0, %s31
    %s51 = sphi 0, %s51
    %s53 = sphi 0, %s51
    %s54 = sphi 0, %s53
    %s68 = sphi 0, %s54
    %s72 = sphi 0, %s72
    %s74 = sphi 0, %s72
    %s75 = sphi 0, %s74
    %s89 = sphi 0, %s75
    %s93 = sphi 0, %s93
    %s95 = sphi 0, %s93
    %s96 = sphi 0, %s95
    %s110 = sphi 0, %s96
    %s114 = sphi 0, %s114
    %s116 = sphi 0, %s114
    %s117 = sphi 0, %s116
    %s131 = sphi 0, %s117
    %s135 = sphi 0, %s135
    %s137 = sphi 0, %s135
    %s138 = sphi 0, %s137
    %s152 = sphi 0, %s138
    %s156 = sphi 0, %s156
    %s158 = sphi 0, %s156
    %s159 = sphi 0, %s158
    %s173 = sphi 0, %s159
    %s177 = sphi 0, %s177
    %s179 = sphi 0, %s177
    %s180 = sphi 0, %s179
    %s194 = sphi 0, %s180
    %s198 = sphi 0, %s198
    %s200 = sphi 0, %s198
    %s201 = sphi 0, %s200
    %s215 = sphi 0, %s201
    %s221 = sphi 0, %s223
    %s224 = sphi 0, %s221
    %s225 = sphi 0, %s224
    %s241 = sphi 0, %s225
    %s247 = sphi 0, %s249
    %s250 = sphi 0, %s247
    %s251 = sphi 0, %s250
    %s267 = sphi 0, %s251
  $region4: #{tpu_custom_call.1} parent=0 // loop_header_branch
    %20 = sbr.rel (%p18) target = $region8
  $region5: #{tpu_custom_call.1} parent=0 // loop_body
    %s22 = ssub.s32 %s17, 1
    %s23 = ssub.s32 %s17, 2
    %s24 = sadd.s32 %s17, 1
    %s25 = ssub.s32 %s17, %s24
    %p26 = scmp.eq.s32.totalorder %s25, 0
    %s28 = sadd.s32 %s27, 1
    %s29 = scalar_select %p26, %s27, %s28
    %p32 = pneg %p26
    %p33 = scmp.eq.s32.totalorder %s17, 1
    %p34 = por %p32, %p33
    %p35 = scmp.ne.s32.totalorder %s27, %s30
    %p36 = scmp.eq.s32.totalorder %s17, 0
    %p37 = por %p35, %p36
    %p38 = scmp.ne.s32.totalorder %s27, %s30
    %p39 = scmp.eq.s32.totalorder %s22, 1
    %p40 = por %p38, %p39
    %p41 = scmp.ne.s32.totalorder %s30, %s31
    %p42 = scmp.eq.s32.totalorder %s22, 0
    %p43 = por %p41, %p42
    %p44 = scmp.ne.s32.totalorder %s30, %s31
    %p45 = scmp.eq.s32.totalorder %s23, 1
    %p46 = por %p44, %p45
    %p48 = scmp.ne.s32.totalorder %s31, %s47
    %p49 = scmp.eq.s32.totalorder %s23, 0
    %p50 = por %p48, %p49
    %s52 = sadd.s32 %s51, 1
    %p55 = scmp.eq.s32.totalorder %s17, 1
    %p56 = scmp.ne.s32.totalorder %s51, %s53
    %p57 = scmp.eq.s32.totalorder %s17, 0
    %p58 = por %p56, %p57
    %p59 = scmp.ne.s32.totalorder %s51, %s53
    %p60 = scmp.eq.s32.totalorder %s22, 1
    %p61 = por %p59, %p60
    %p62 = scmp.ne.s32.totalorder %s53, %s54
    %p63 = scmp.eq.s32.totalorder %s22, 0
    %p64 = por %p62, %p63
    %p65 = scmp.ne.s32.totalorder %s53, %s54
    %p66 = scmp.eq.s32.totalorder %s23, 1
    %p67 = por %p65, %p66
    %p69 = scmp.ne.s32.totalorder %s54, %s68
    %p70 = scmp.eq.s32.totalorder %s23, 0
    %p71 = por %p69, %p70
    %s73 = sadd.s32 %s72, 1
    %p76 = scmp.eq.s32.totalorder %s17, 1
    %p77 = scmp.ne.s32.totalorder %s72, %s74
    %p78 = scmp.eq.s32.totalorder %s17, 0
    %p79 = por %p77, %p78
    %p80 = scmp.ne.s32.totalorder %s72, %s74
    %p81 = scmp.eq.s32.totalorder %s22, 1
    %p82 = por %p80, %p81
    %p83 = scmp.ne.s32.totalorder %s74, %s75
    %p84 = scmp.eq.s32.totalorder %s22, 0
    %p85 = por %p83, %p84
    %p86 = scmp.ne.s32.totalorder %s74, %s75
    %p87 = scmp.eq.s32.totalorder %s23, 1
    %p88 = por %p86, %p87
    %p90 = scmp.ne.s32.totalorder %s75, %s89
    %p91 = scmp.eq.s32.totalorder %s23, 0
    %p92 = por %p90, %p91
    %s94 = sadd.s32 %s93, 1
    %p97 = scmp.eq.s32.totalorder %s17, 1
    %p98 = scmp.ne.s32.totalorder %s93, %s95
    %p99 = scmp.eq.s32.totalorder %s17, 0
    %p100 = por %p98, %p99
    %p101 = scmp.ne.s32.totalorder %s93, %s95
    %p102 = scmp.eq.s32.totalorder %s22, 1
    %p103 = por %p101, %p102
    %p104 = scmp.ne.s32.totalorder %s95, %s96
    %p105 = scmp.eq.s32.totalorder %s22, 0
    %p106 = por %p104, %p105
    %p107 = scmp.ne.s32.totalorder %s95, %s96
    %p108 = scmp.eq.s32.totalorder %s23, 1
    %p109 = por %p107, %p108
    %p111 = scmp.ne.s32.totalorder %s96, %s110
    %p112 = scmp.eq.s32.totalorder %s23, 0
    %p113 = por %p111, %p112
    %s115 = sadd.s32 %s114, 1
    %p118 = scmp.eq.s32.totalorder %s17, 1
    %p119 = scmp.ne.s32.totalorder %s114, %s116
    %p120 = scmp.eq.s32.totalorder %s17, 0
    %p121 = por %p119, %p120
    %p122 = scmp.ne.s32.totalorder %s114, %s116
    %p123 = scmp.eq.s32.totalorder %s22, 1
    %p124 = por %p122, %p123
    %p125 = scmp.ne.s32.totalorder %s116, %s117
    %p126 = scmp.eq.s32.totalorder %s22, 0
    %p127 = por %p125, %p126
    %p128 = scmp.ne.s32.totalorder %s116, %s117
    %p129 = scmp.eq.s32.totalorder %s23, 1
    %p130 = por %p128, %p129
    %p132 = scmp.ne.s32.totalorder %s117, %s131
    %p133 = scmp.eq.s32.totalorder %s23, 0
    %p134 = por %p132, %p133
    %s136 = sadd.s32 %s135, 1
    %p139 = scmp.eq.s32.totalorder %s17, 1
    %p140 = scmp.ne.s32.totalorder %s135, %s137
    %p141 = scmp.eq.s32.totalorder %s17, 0
    %p142 = por %p140, %p141
    %p143 = scmp.ne.s32.totalorder %s135, %s137
    %p144 = scmp.eq.s32.totalorder %s22, 1
    %p145 = por %p143, %p144
    %p146 = scmp.ne.s32.totalorder %s137, %s138
    %p147 = scmp.eq.s32.totalorder %s22, 0
    %p148 = por %p146, %p147
    %p149 = scmp.ne.s32.totalorder %s137, %s138
    %p150 = scmp.eq.s32.totalorder %s23, 1
    %p151 = por %p149, %p150
    %p153 = scmp.ne.s32.totalorder %s138, %s152
    %p154 = scmp.eq.s32.totalorder %s23, 0
    %p155 = por %p153, %p154
    %s157 = sadd.s32 %s156, 1
    %p160 = scmp.eq.s32.totalorder %s17, 1
    %p161 = scmp.ne.s32.totalorder %s156, %s158
    %p162 = scmp.eq.s32.totalorder %s17, 0
    %p163 = por %p161, %p162
    %p164 = scmp.ne.s32.totalorder %s156, %s158
    %p165 = scmp.eq.s32.totalorder %s22, 1
    %p166 = por %p164, %p165
    %p167 = scmp.ne.s32.totalorder %s158, %s159
    %p168 = scmp.eq.s32.totalorder %s22, 0
    %p169 = por %p167, %p168
    %p170 = scmp.ne.s32.totalorder %s158, %s159
    %p171 = scmp.eq.s32.totalorder %s23, 1
    %p172 = por %p170, %p171
    %p174 = scmp.ne.s32.totalorder %s159, %s173
    %p175 = scmp.eq.s32.totalorder %s23, 0
    %p176 = por %p174, %p175
    %s178 = sadd.s32 %s177, 1
    %p181 = scmp.eq.s32.totalorder %s17, 1
    %p182 = scmp.ne.s32.totalorder %s177, %s179
    %p183 = scmp.eq.s32.totalorder %s17, 0
    %p184 = por %p182, %p183
    %p185 = scmp.ne.s32.totalorder %s177, %s179
    %p186 = scmp.eq.s32.totalorder %s22, 1
    %p187 = por %p185, %p186
    %p188 = scmp.ne.s32.totalorder %s179, %s180
    %p189 = scmp.eq.s32.totalorder %s22, 0
    %p190 = por %p188, %p189
    %p191 = scmp.ne.s32.totalorder %s179, %s180
    %p192 = scmp.eq.s32.totalorder %s23, 1
    %p193 = por %p191, %p192
    %p195 = scmp.ne.s32.totalorder %s180, %s194
    %p196 = scmp.eq.s32.totalorder %s23, 0
    %p197 = por %p195, %p196
    %s199 = sadd.s32 %s198, 1
    %p202 = scmp.eq.s32.totalorder %s17, 1
    %p203 = scmp.ne.s32.totalorder %s198, %s200
    %p204 = scmp.eq.s32.totalorder %s17, 0
    %p205 = por %p203, %p204
    %p206 = scmp.ne.s32.totalorder %s198, %s200
    %p207 = scmp.eq.s32.totalorder %s22, 1
    %p208 = por %p206, %p207
    %p209 = scmp.ne.s32.totalorder %s200, %s201
    %p210 = scmp.eq.s32.totalorder %s22, 0
    %p211 = por %p209, %p210
    %p212 = scmp.ne.s32.totalorder %s200, %s201
    %p213 = scmp.eq.s32.totalorder %s23, 1
    %p214 = por %p212, %p213
    %p216 = scmp.ne.s32.totalorder %s201, %s215
    %p217 = scmp.eq.s32.totalorder %s23, 0
    %p218 = por %p216, %p217
    %s219 = ssub.s32 %s17, %s24
    %p220 = scmp.eq.s32.totalorder %s219, 0
    %s222 = sadd.s32 %s221, 1
    %s223 = scalar_select %p220, %s221, %s222
    %p226 = pneg %p220
    %p227 = scmp.eq.s32.totalorder %s17, 1
    %p228 = por %p226, %p227
    %p229 = scmp.ne.s32.totalorder %s221, %s224
    %p230 = scmp.eq.s32.totalorder %s17, 0
    %p231 = por %p229, %p230
    %p232 = scmp.ne.s32.totalorder %s221, %s224
    %p233 = scmp.eq.s32.totalorder %s22, 1
    %p234 = por %p232, %p233
    %p235 = scmp.ne.s32.totalorder %s224, %s225
    %p236 = scmp.eq.s32.totalorder %s22, 0
    %p237 = por %p235, %p236
    %p238 = scmp.ne.s32.totalorder %s224, %s225
    %p239 = scmp.eq.s32.totalorder %s23, 1
    %p240 = por %p238, %p239
    %p242 = scmp.ne.s32.totalorder %s225, %s241
    %p243 = scmp.eq.s32.totalorder %s23, 0
    %p244 = por %p242, %p243
    %s245 = ssub.s32 %s17, %s24
    %p246 = scmp.eq.s32.totalorder %s245, 0
    %s248 = sadd.s32 %s247, 1
    %s249 = scalar_select %p246, %s247, %s248
    %p252 = pneg %p246
    %p253 = scmp.eq.s32.totalorder %s17, 1
    %p254 = por %p252, %p253
    %p255 = scmp.ne.s32.totalorder %s247, %s250
    %p256 = scmp.eq.s32.totalorder %s17, 0
    %p257 = por %p255, %p256
    %p258 = scmp.ne.s32.totalorder %s247, %s250
    %p259 = scmp.eq.s32.totalorder %s22, 1
    %p260 = por %p258, %p259
    %p261 = scmp.ne.s32.totalorder %s250, %s251
    %p262 = scmp.eq.s32.totalorder %s22, 0
    %p263 = por %p261, %p262
    %p264 = scmp.ne.s32.totalorder %s250, %s251
    %p265 = scmp.eq.s32.totalorder %s23, 1
    %p266 = por %p264, %p265
    %p268 = scmp.ne.s32.totalorder %s251, %s267
    %p269 = scmp.eq.s32.totalorder %s23, 0
    %p270 = por %p268, %p269
    %p271 = scmp.le.s32.totalorder 1, %s17
    %p272 = scmp.lt.s32.totalorder %s17, 3
    %p273 = pnand %p271, %p272
    %p274 = pneg %p273
    // Predicated region
    $region9: #{tpu_custom_call.1} parent=5 // pred_check
      _
    $region10: #{tpu_custom_call.1} parent=5 // pred_check_branch
      %276 = sbr.rel (%p273) target = $region12
    $region11: #{tpu_custom_call.1} parent=5 // pred_region
      %s277 = ssub.s32 %s17, 1
      // Predicated region
      $region13: #{tpu_custom_call.1} parent=11 // pred_check
        %p278 = pneg %p64
      $region14: #{tpu_custom_call.1} parent=11 // pred_check_branch
        %280 = sbr.rel (%p278) target = $region16
      $region15: #{tpu_custom_call.1} parent=11 // pred_region
        _
      $region16: #{tpu_custom_call.1} parent=11 // pred_fallthru
        _
      // Predicated region
      $region17: #{tpu_custom_call.1} parent=11 // pred_check
        %p281 = pneg %p85
      $region18: #{tpu_custom_call.1} parent=11 // pred_check_branch
        %283 = sbr.rel (%p281) target = $region20
      $region19: #{tpu_custom_call.1} parent=11 // pred_region
        _
      $region20: #{tpu_custom_call.1} parent=11 // pred_fallthru
        _
      // Predicated region
      $region21: #{tpu_custom_call.1} parent=11 // pred_check
        %p284 = pneg %p106
      $region22: #{tpu_custom_call.1} parent=11 // pred_check_branch
        %286 = sbr.rel (%p284) target = $region24
      $region23: #{tpu_custom_call.1} parent=11 // pred_region
        _
      $region24: #{tpu_custom_call.1} parent=11 // pred_fallthru
        _
      // Predicated region
      $region25: #{tpu_custom_call.1} parent=11 // pred_check
        %p287 = pneg %p127
      $region26: #{tpu_custom_call.1} parent=11 // pred_check_branch
        %289 = sbr.rel (%p287) target = $region28
      $region27: #{tpu_custom_call.1} parent=11 // pred_region
        _
      $region28: #{tpu_custom_call.1} parent=11 // pred_fallthru
        _
      // Predicated region
      $region29: #{tpu_custom_call.1} parent=11 // pred_check
        %p290 = pneg %p148
      $region30: #{tpu_custom_call.1} parent=11 // pred_check_branch
        %292 = sbr.rel (%p290) target = $region32
      $region31: #{tpu_custom_call.1} parent=11 // pred_region
        _
      $region32: #{tpu_custom_call.1} parent=11 // pred_fallthru
        _
      // Predicated region
      $region33: #{tpu_custom_call.1} parent=11 // pred_check
        %p293 = pneg %p169
      $region34: #{tpu_custom_call.1} parent=11 // pred_check_branch
        %295 = sbr.rel (%p293) target = $region36
      $region35: #{tpu_custom_call.1} parent=11 // pred_region
        _
      $region36: #{tpu_custom_call.1} parent=11 // pred_fallthru
        _
      // Predicated region
      $region37: #{tpu_custom_call.1} parent=11 // pred_check
        %p296 = pneg %p190
      $region38: #{tpu_custom_call.1} parent=11 // pred_check_branch
        %298 = sbr.rel (%p296) target = $region40
      $region39: #{tpu_custom_call.1} parent=11 // pred_region
        _
      $region40: #{tpu_custom_call.1} parent=11 // pred_fallthru
        _
      // Predicated region
      $region41: #{tpu_custom_call.1} parent=11 // pred_check
        %p299 = pneg %p211
      $region42: #{tpu_custom_call.1} parent=11 // pred_check_branch
        %301 = sbr.rel (%p299) target = $region44
      $region43: #{tpu_custom_call.1} parent=11 // pred_region
        _
      $region44: #{tpu_custom_call.1} parent=11 // pred_fallthru
        _
    $region12: #{tpu_custom_call.1} parent=5 // pred_fallthru
      _
    %p302 = scmp.lt.s32.totalorder %s17, 2
    // Predicated region
    $region45: #{tpu_custom_call.1} parent=5 // pred_check
      %p303 = pneg %p302
    $region46: #{tpu_custom_call.1} parent=5 // pred_check_branch
      %305 = sbr.rel (%p303) target = $region48
    $region47: #{tpu_custom_call.1} parent=5 // pred_region
      // Predicated region
      $region49: #{tpu_custom_call.1} parent=47 // pred_check
        %p306 = pneg %p37
      $region50: #{tpu_custom_call.1} parent=47 // pred_check_branch
        %308 = sbr.rel (%p306) target = $region52
      $region51: #{tpu_custom_call.1} parent=47 // pred_region
        %s309 = smul.u32 4, %s17
        %p310 = scmp.lt.s32.totalorder %s309, 7
        %s311 = scalar_select %p310, %s309, 7
        %s312 = smul.addr %s311, 4
        %s313 = scalar_lea.vmem %s0, %s312
        %s314 = smul.u32 4, %s17
      $region52: #{tpu_custom_call.1} parent=47 // pred_fallthru
        _
    $region48: #{tpu_custom_call.1} parent=5 // pred_fallthru
      _
    %p315 = scmp.le.s32.totalorder 1, %s17
    %p316 = scmp.lt.s32.totalorder %s17, 3
    %p317 = pnand %p315, %p316
    %p318 = pneg %p317
    // Predicated region
    $region53: #{tpu_custom_call.1} parent=5 // pred_check
      _
    $region54: #{tpu_custom_call.1} parent=5 // pred_check_branch
      %320 = sbr.rel (%p317) target = $region56
    $region55: #{tpu_custom_call.1} parent=5 // pred_region
      %s321 = ssub.s32 %s17, 1
      %s322 = smul.u32 4, %s22
      %p323 = scmp.lt.s32.totalorder %s322, 7
      %s324 = scalar_select %p323, %s322, 7
      %s325 = smul.addr %s324, 4
      %s326 = scalar_lea.vmem %s0, %s325
      %p327 = pneg %p43
      %p328 = pneg %p40
      %p329 = pneg %p64
      %p330 = pneg %p61
      %p331 = pneg %p85
      %p332 = pneg %p82
      %p333 = pneg %p106
      %p334 = pneg %p103
      %p335 = pneg %p127
      %p336 = pneg %p124
      %p337 = pneg %p148
      %p338 = pneg %p145
      %p339 = pneg %p169
      %p340 = pneg %p166
      %p341 = pneg %p190
      %p342 = pneg %p187
      %p343 = pneg %p211
      %p344 = pneg %p208
      %p345 = pneg %p237
      %p346 = pneg %p234
      %s347 = smul.u32 4, %s22
      %p348 = scmp.lt.s32.totalorder %s347, 7
      %s349 = scalar_select %p348, %s347, 7
      %s350 = smul.addr %s349, 8
      %s351 = scalar_lea.vmem %s9, %s350
      %p352 = pneg %p263
      %p353 = pneg %p260
      %s354 = smul.u32 4, %s22
      %p355 = scmp.lt.s32.totalorder %s354, 7
      %s356 = scalar_select %p355, %s354, 7
      %s357 = smul.addr %s356, 8
      %s358 = scalar_lea.vmem %s10, %s357
      %s359 = smul.u32 4, %s22
      %p360 = scmp.lt.s32.totalorder %s359, 7
      %s361 = scalar_select %p360, %s359, 7
      %s362 = smul.addr %s361, 4
      %s363 = scalar_lea.vmem %s0, %s362
      %s364 = smul.u32 4, %s22
      %s365 = smul.u32 4, %s22
      %p366 = scmp.lt.s32.totalorder %s365, 7
      %s367 = scalar_select %p366, %s365, 7
      %s368 = smul.addr %s367, 8
      %s369 = scalar_lea.vmem %s9, %s368
      %s370 = smul.u32 4, %s22
      %s371 = smul.u32 4, %s22
      %p372 = scmp.lt.s32.totalorder %s371, 7
      %s373 = scalar_select %p372, %s371, 7
      %s374 = smul.addr %s373, 8
      %s375 = scalar_lea.vmem %s10, %s374
      %s376 = smul.u32 4, %s22
      %v378 = vld [vmem:[%s363] sm:$0xf]
      %v379 = vld [vmem:[%s363 + $0x4] sm:$0xf]
      %v380 = vld [vmem:[%s363 + $0x8] sm:$0xf]
      %v381 = vld [vmem:[%s363 + $0xc] sm:$0xf]
      %v382 = vld [vmem:[%s1] sm:$0xf]
      %v383 = vld [vmem:[%s1 + $0x4] sm:$0xf]
      %v384 = vld [vmem:[%s2] sm:$0x1]
      %v386 = vlaneseq
      %v387 = vshrl.u32 %v386, 7
      %v388 = vsub.s32 0, %v387
      %v389 = vrot.slane %v384, %v388
      %v395 = vunpack.c.l.b16 %v378
      %v396 = vunpack.c.l.b16 %v379
      %v397 = vunpack.c.l.b16 %v380
      %v398 = vunpack.c.l.b16 %v381
      %v399 = vpack.c.b16 %v396, %v395
      %v400 = vpack.c.b16 %v398, %v397
      %v403 = vunpack.c.l.b16 %v382
      %v404 = vunpack.c.l.b16 %v383
      %v405 = vpack.c.b16 %v404, %v403
      %vm407 = vcmask 130048
      %v409 = vsel %vm407, %v399, 0
      %v412 = vsel %vm407, %v400, 0
      %414 = vmatprep.subr.bf16.mxu0 0
      %415 = vmatpush1.bf16.msra.mxu0 %v405
      %416 = vmatprep.subr.bf16.mxu0 0
      %417 = vmatpush1.bf16.msra.mxu0 0
      %418 = vmatprep.subr.bf16.mxu0 0
      %419 = vmatpush1.bf16.msra.mxu0 0
      %420 = vmatprep.subr.bf16.mxu0 0
      %421 = vmatpush1.bf16.msra.mxu0 0
      %422 = vmatprep.subr.bf16.mxu0 0
      %423 = vmatpush1.bf16.msra.mxu0 0
      %424 = vmatprep.subr.bf16.mxu0 0
      %425 = vmatpush1.bf16.msra.mxu0 0
      %426 = vmatprep.subr.bf16.mxu0 0
      %427 = vmatpush1.bf16.msra.mxu0 0
      %428 = vmatprep.subr.bf16.mxu0 0
      %429 = vmatpush1.bf16.msra.mxu0 0
      %430 = vmatprep.subr.bf16.mxu0 0
      %431 = vmatpush1.bf16.msra.mxu0 0
      %432 = vmatprep.subr.bf16.mxu0 0
      %433 = vmatpush1.bf16.msra.mxu0 0
      %434 = vmatprep.subr.bf16.mxu0 0
      %435 = vmatpush1.bf16.msra.mxu0 0
      %436 = vmatprep.subr.bf16.mxu0 0
      %437 = vmatpush1.bf16.msra.mxu0 0
      %438 = vmatprep.subr.bf16.mxu0 0
      %439 = vmatpush1.bf16.msra.mxu0 0
      %440 = vmatprep.subr.bf16.mxu0 0
      %441 = vmatpush1.bf16.msra.mxu0 0
      %442 = vmatprep.subr.bf16.mxu0 0
      %443 = vmatpush1.bf16.msra.mxu0 0
      %444 = vmatprep.subr.bf16.mxu0 0
      %445 = vmatpush1.bf16.msra.mxu0 0
      %446 = vmatprep.mubr.bf16.mxu0 0
      %447 = vmatmul.mubr.bf16.gmra.mrb[0].mxu0 %v409
      %v448 = vpop.f32.mrb[0].mxu0
      %v449 = vadd.f32 %v389, %v448
      %v450 = vpop.f32.mrb[0].mxu0
      %v451 = vpop.f32.mrb[0].mxu0
      %v452 = vadd.f32 %v389, %v451
      %v453 = vpop.f32.mrb[0].mxu0
      %454 = vmatprep.mubr.bf16.mxu0 0
      %455 = vmatmul.mubr.bf16.gmra.mrb[0].mxu0 %v412
      %v456 = vpop.f32.mrb[0].mxu0
      %v457 = vadd.f32 %v389, %v456
      %v458 = vpop.f32.mrb[0].mxu0
      %v459 = vpop.f32.mrb[0].mxu0
      %v460 = vadd.f32 %v389, %v459
      %v461 = vpop.f32.mrb[0].mxu0
      %462 = vdwg.mxu0
      %v463 = vmax.f32 %v449, 0.0
      %v464 = vmax.f32 %v452, 0.0
      %v465 = vmax.f32 %v457, 0.0
      %v466 = vmax.f32 %v460, 0.0
      %v467 = vpack.c.bf16 %v464, %v463
      %v468 = vpack.c.bf16 %v466, %v465
      %v469 = vld [vmem:[%s3] sm:$0xf]
      %v470 = vld [vmem:[%s3 + $0x4] sm:$0xf]
      %v471 = vld [vmem:[%s3 + $0x8] sm:$0xf]
      %v472 = vld [vmem:[%s3 + $0xc] sm:$0xf]
      %v473 = vld [vmem:[%s4] sm:$0x1]
      %v475 = vlaneseq
      %v476 = vshrl.u32 %v475, 7
      %v477 = vsub.s32 0, %v476
      %v478 = vrot.slane %v473, %v477
      %v484 = vunpack.c.l.b16 %v469
      %v485 = vunpack.c.l.b16 %v470
      %v486 = vunpack.c.l.b16 %v471
      %v487 = vunpack.c.l.b16 %v472
      %v488 = vpack.c.b16 %v485, %v484
      %v489 = vpack.c.b16 %v487, %v486
      %vm492 = vcmask 261120
      %v494 = vsel %vm492, %v467, 0
      %v497 = vsel %vm492, %v468, 0
      %499 = vmatprep.subr.bf16.mxu0 0
      %500 = vmatpush1.bf16.msra.mxu0 %v488
      %501 = vmatprep.subr.bf16.mxu0 0
      %502 = vmatpush1.bf16.msra.mxu0 %v489
      %503 = vmatprep.subr.bf16.mxu0 0
      %504 = vmatpush1.bf16.msra.mxu0 0
      %505 = vmatprep.subr.bf16.mxu0 0
      %506 = vmatpush1.bf16.msra.mxu0 0
      %507 = vmatprep.subr.bf16.mxu0 0
      %508 = vmatpush1.bf16.msra.mxu0 0
      %509 = vmatprep.subr.bf16.mxu0 0
      %510 = vmatpush1.bf16.msra.mxu0 0
      %511 = vmatprep.subr.bf16.mxu0 0
      %512 = vmatpush1.bf16.msra.mxu0 0
      %513 = vmatprep.subr.bf16.mxu0 0
      %514 = vmatpush1.bf16.msra.mxu0 0
      %515 = vmatprep.subr.bf16.mxu0 0
      %516 = vmatpush1.bf16.msra.mxu0 0
      %517 = vmatprep.subr.bf16.mxu0 0
      %518 = vmatpush1.bf16.msra.mxu0 0
      %519 = vmatprep.subr.bf16.mxu0 0
      %520 = vmatpush1.bf16.msra.mxu0 0
      %521 = vmatprep.subr.bf16.mxu0 0
      %522 = vmatpush1.bf16.msra.mxu0 0
      %523 = vmatprep.subr.bf16.mxu0 0
      %524 = vmatpush1.bf16.msra.mxu0 0
      %525 = vmatprep.subr.bf16.mxu0 0
      %526 = vmatpush1.bf16.msra.mxu0 0
      %527 = vmatprep.subr.bf16.mxu0 0
      %528 = vmatpush1.bf16.msra.mxu0 0
      %529 = vmatprep.subr.bf16.mxu0 0
      %530 = vmatpush1.bf16.msra.mxu0 0
      %531 = vmatprep.mubr.bf16.mxu0 0
      %532 = vmatmul.mubr.bf16.gmra.mrb[0].mxu0 %v494
      %v533 = vpop.f32.mrb[0].mxu0
      %v534 = vadd.f32 %v478, %v533
      %v535 = vpop.f32.mrb[0].mxu0
      %v536 = vpop.f32.mrb[0].mxu0
      %v537 = vadd.f32 %v478, %v536
      %v538 = vpop.f32.mrb[0].mxu0
      %539 = vmatprep.mubr.bf16.mxu0 0
      %540 = vmatmul.mubr.bf16.gmra.mrb[0].mxu0 %v497
      %v541 = vpop.f32.mrb[0].mxu0
      %v542 = vadd.f32 %v478, %v541
      %v543 = vpop.f32.mrb[0].mxu0
      %v544 = vpop.f32.mrb[0].mxu0
      %v545 = vadd.f32 %v478, %v544
      %v546 = vpop.f32.mrb[0].mxu0
      %547 = vdwg.mxu0
      %v548 = vmax.f32 %v534, 0.0
      %v549 = vmax.f32 %v537, 0.0
      %v550 = vmax.f32 %v542, 0.0
      %v551 = vmax.f32 %v545, 0.0
      %vm552 = vcmask 64512
      %553 = vst.msk [vmem:[%s369] sm:$0xff] %vm552, %v548
      %554 = vst.msk [vmem:[%s369 + $0x8] sm:$0xff] %vm552, %v549
      %555 = vst.msk [vmem:[%s369 + $0x10] sm:$0xff] %vm552, %v550
      %556 = vst.msk [vmem:[%s369 + $0x18] sm:$0xff] %vm552, %v551
      %v557 = vpack.c.bf16 %v549, %v548
      %v558 = vpack.c.bf16 %v551, %v550
      %v559 = vld [vmem:[%s5] sm:$0xf]
      %v560 = vld [vmem:[%s6] sm:$0x1]
      %v562 = vlaneseq
      %v563 = vshrl.u32 %v562, 7
      %v564 = vsub.s32 0, %v563
      %v565 = vrot.slane %v560, %v564
      %v568 = vsel %vm552, %v557, 0
      %v571 = vsel %vm552, %v558, 0
      %vm573 = vcmask 1043456
      %v575 = vsel %vm573, %v559, 0
      %577 = vmatprep.subr.bf16.mxu0 0
      %578 = vmatpush1.bf16.msra.mxu0 %v575
      %579 = vmatprep.subr.bf16.mxu0 0
      %580 = vmatpush1.bf16.msra.mxu0 0
      %581 = vmatprep.subr.bf16.mxu0 0
      %582 = vmatpush1.bf16.msra.mxu0 0
      %583 = vmatprep.subr.bf16.mxu0 0
      %584 = vmatpush1.bf16.msra.mxu0 0
      %585 = vmatprep.subr.bf16.mxu0 0
      %586 = vmatpush1.bf16.msra.mxu0 0
      %587 = vmatprep.subr.bf16.mxu0 0
      %588 = vmatpush1.bf16.msra.mxu0 0
      %589 = vmatprep.subr.bf16.mxu0 0
      %590 = vmatpush1.bf16.msra.mxu0 0
      %591 = vmatprep.subr.bf16.mxu0 0
      %592 = vmatpush1.bf16.msra.mxu0 0
      %593 = vmatprep.subr.bf16.mxu0 0
      %594 = vmatpush1.bf16.msra.mxu0 0
      %595 = vmatprep.subr.bf16.mxu0 0
      %596 = vmatpush1.bf16.msra.mxu0 0
      %597 = vmatprep.subr.bf16.mxu0 0
      %598 = vmatpush1.bf16.msra.mxu0 0
      %599 = vmatprep.subr.bf16.mxu0 0
      %600 = vmatpush1.bf16.msra.mxu0 0
      %601 = vmatprep.subr.bf16.mxu0 0
      %602 = vmatpush1.bf16.msra.mxu0 0
      %603 = vmatprep.subr.bf16.mxu0 0
      %604 = vmatpush1.bf16.msra.mxu0 0
      %605 = vmatprep.subr.bf16.mxu0 0
      %606 = vmatpush1.bf16.msra.mxu0 0
      %607 = vmatprep.subr.bf16.mxu0 0
      %608 = vmatpush1.bf16.msra.mxu0 0
      %609 = vmatprep.mubr.bf16.mxu0 0
      %610 = vmatmul.mubr.bf16.gmra.mrb[0].mxu0 %v568
      %v611 = vpop.f32.mrb[0].mxu0
      %v612 = vadd.f32 %v565, %v611
      %v613 = vpop.f32.mrb[0].mxu0
      %v614 = vpop.f32.mrb[0].mxu0
      %v615 = vadd.f32 %v565, %v614
      %v616 = vpop.f32.mrb[0].mxu0
      %617 = vmatprep.mubr.bf16.mxu0 0
      %618 = vmatmul.mubr.bf16.gmra.mrb[0].mxu0 %v571
      %v619 = vpop.f32.mrb[0].mxu0
      %v620 = vadd.f32 %v565, %v619
      %v621 = vpop.f32.mrb[0].mxu0
      %v622 = vpop.f32.mrb[0].mxu0
      %v623 = vadd.f32 %v565, %v622
      %v624 = vpop.f32.mrb[0].mxu0
      %625 = vdwg.mxu0
      %v626 = vmax.f32 %v612, 0.0
      %v627 = vmax.f32 %v615, 0.0
      %v628 = vmax.f32 %v620, 0.0
      %v629 = vmax.f32 %v623, 0.0
      %v630 = vpack.c.bf16 %v627, %v626
      %v631 = vpack.c.bf16 %v629, %v628
      %v632 = vld [vmem:[%s7] sm:$0xf]
      %v633 = vld [vmem:[%s7 + $0x4] sm:$0xf]
      %v634 = vld [vmem:[%s7 + $0x8] sm:$0xf]
      %v635 = vld [vmem:[%s7 + $0xc] sm:$0xf]
      %v636 = vld [vmem:[%s8] sm:$0x1]
      %v638 = vlaneseq
      %v639 = vshrl.u32 %v638, 7
      %v640 = vsub.s32 0, %v639
      %v641 = vrot.slane %v636, %v640
      %v647 = vunpack.c.l.b16 %v632
      %v648 = vunpack.c.l.b16 %v633
      %v649 = vunpack.c.l.b16 %v634
      %v650 = vunpack.c.l.b16 %v635
      %v651 = vpack.c.b16 %v648, %v647
      %v652 = vpack.c.b16 %v650, %v649
      %v656 = vsel %vm492, %v630, 0
      %v659 = vsel %vm492, %v631, 0
      %661 = vmatprep.subr.bf16.mxu0 0
      %662 = vmatpush1.bf16.msra.mxu0 %v651
      %663 = vmatprep.subr.bf16.mxu0 0
      %664 = vmatpush1.bf16.msra.mxu0 %v652
      %665 = vmatprep.subr.bf16.mxu0 0
      %666 = vmatpush1.bf16.msra.mxu0 0
      %667 = vmatprep.subr.bf16.mxu0 0
      %668 = vmatpush1.bf16.msra.mxu0 0
      %669 = vmatprep.subr.bf16.mxu0 0
      %670 = vmatpush1.bf16.msra.mxu0 0
      %671 = vmatprep.subr.bf16.mxu0 0
      %672 = vmatpush1.bf16.msra.mxu0 0
      %673 = vmatprep.subr.bf16.mxu0 0
      %674 = vmatpush1.bf16.msra.mxu0 0
      %675 = vmatprep.subr.bf16.mxu0 0
      %676 = vmatpush1.bf16.msra.mxu0 0
      %677 = vmatprep.subr.bf16.mxu0 0
      %678 = vmatpush1.bf16.msra.mxu0 0
      %679 = vmatprep.subr.bf16.mxu0 0
      %680 = vmatpush1.bf16.msra.mxu0 0
      %681 = vmatprep.subr.bf16.mxu0 0
      %682 = vmatpush1.bf16.msra.mxu0 0
      %683 = vmatprep.subr.bf16.mxu0 0
      %684 = vmatpush1.bf16.msra.mxu0 0
      %685 = vmatprep.subr.bf16.mxu0 0
      %686 = vmatpush1.bf16.msra.mxu0 0
      %687 = vmatprep.subr.bf16.mxu0 0
      %688 = vmatpush1.bf16.msra.mxu0 0
      %689 = vmatprep.subr.bf16.mxu0 0
      %690 = vmatpush1.bf16.msra.mxu0 0
      %691 = vmatprep.subr.bf16.mxu0 0
      %692 = vmatpush1.bf16.msra.mxu0 0
      %693 = vmatprep.mubr.bf16.mxu0 0
      %694 = vmatmul.mubr.bf16.gmra.mrb[0].mxu0 %v656
      %v695 = vpop.f32.mrb[0].mxu0
      %v696 = vadd.f32 %v641, %v695
      %v697 = vpop.f32.mrb[0].mxu0
      %v698 = vpop.f32.mrb[0].mxu0
      %v699 = vadd.f32 %v641, %v698
      %v700 = vpop.f32.mrb[0].mxu0
      %701 = vmatprep.mubr.bf16.mxu0 0
      %702 = vmatmul.mubr.bf16.gmra.mrb[0].mxu0 %v659
      %v703 = vpop.f32.mrb[0].mxu0
      %v704 = vadd.f32 %v641, %v703
      %v705 = vpop.f32.mrb[0].mxu0
      %v706 = vpop.f32.mrb[0].mxu0
      %v707 = vadd.f32 %v641, %v706
      %v708 = vpop.f32.mrb[0].mxu0
      %709 = vdwg.mxu0
      %v710 = vxor.u32 %v696, 2147483648
      %v711 = vxor.u32 %v699, 2147483648
      %v712 = vxor.u32 %v704, 2147483648
      %v713 = vxor.u32 %v707, 2147483648
      %v714 = vmul.f32 %v710, 1.442695
      %v715 = vpow.pop %v714
      %v716 = vmul.f32 %v711, 1.442695
      %v717 = vpow.pop %v716
      %v718 = vmul.f32 %v712, 1.442695
      %v719 = vpow.pop %v718
      %v720 = vmul.f32 %v713, 1.442695
      %v721 = vpow.pop %v720
      %v722 = vadd.f32 %v715, 1.0
      %v723 = vadd.f32 %v717, 1.0
      %v724 = vadd.f32 %v719, 1.0
      %v725 = vadd.f32 %v721, 1.0
      %v726 = vrcp.pop %v722
      %v727 = vmul.f32 1.0, %v726
      %v728 = vrcp.pop %v723
      %v729 = vmul.f32 1.0, %v728
      %v730 = vrcp.pop %v724
      %v731 = vmul.f32 1.0, %v730
      %v732 = vrcp.pop %v725
      %v733 = vmul.f32 1.0, %v732
      %734 = vst.msk [vmem:[%s375] sm:$0xff] %vm407, %v727
      %735 = vst.msk [vmem:[%s375 + $0x8] sm:$0xff] %vm407, %v729
      %736 = vst.msk [vmem:[%s375 + $0x10] sm:$0xff] %vm407, %v731
      %737 = vst.msk [vmem:[%s375 + $0x18] sm:$0xff] %vm407, %v733
      %s738 = smul.u32 4, %s22
      %p739 = scmp.lt.s32.totalorder %s738, 7
      %s740 = scalar_select %p739, %s738, 7
      %s741 = smul.addr %s740, 8
      %s742 = scalar_lea.vmem %s9, %s741
      %s743 = smul.u32 4, %s22
      %p744 = scmp.lt.s32.totalorder %s743, 7
      %s745 = scalar_select %p744, %s743, 7
      %s746 = smul.addr %s745, 8
      %s747 = scalar_lea.vmem %s10, %s746
      // Predicated region
      $region57: #{tpu_custom_call.1} parent=55 // pred_check
        %p748 = pneg %p234
      $region58: #{tpu_custom_call.1} parent=55 // pred_check_branch
        %750 = sbr.rel (%p748) target = $region60
      $region59: #{tpu_custom_call.1} parent=55 // pred_region
        %s751 = smul.u32 4, %s22
      $region60: #{tpu_custom_call.1} parent=55 // pred_fallthru
        _
      // Predicated region
      $region61: #{tpu_custom_call.1} parent=55 // pred_check
        %p752 = pneg %p260
      $region62: #{tpu_custom_call.1} parent=55 // pred_check_branch
        %754 = sbr.rel (%p752) target = $region64
      $region63: #{tpu_custom_call.1} parent=55 // pred_region
        %s755 = smul.u32 4, %s22
      $region64: #{tpu_custom_call.1} parent=55 // pred_fallthru
        _
    $region56: #{tpu_custom_call.1} parent=5 // pred_fallthru
      _
    %p756 = scmp.le.s32.totalorder 2, %s17
    // Predicated region
    $region65: #{tpu_custom_call.1} parent=5 // pred_check
      %p757 = pneg %p756
    $region66: #{tpu_custom_call.1} parent=5 // pred_check_branch
      %759 = sbr.rel (%p757) target = $region68
    $region67: #{tpu_custom_call.1} parent=5 // pred_region
      %s760 = ssub.s32 %s17, 2
      // Predicated region
      $region69: #{tpu_custom_call.1} parent=67 // pred_check
        %p761 = pneg %p240
      $region70: #{tpu_custom_call.1} parent=67 // pred_check_branch
        %763 = sbr.rel (%p761) target = $region72
      $region71: #{tpu_custom_call.1} parent=67 // pred_region
        %s764 = smul.u32 4, %s23
        %p765 = scmp.lt.s32.totalorder %s764, 7
        %s766 = scalar_select %p765, %s764, 7
        %s767 = smul.addr %s766, 8
        %s768 = scalar_lea.vmem %s9, %s767
      $region72: #{tpu_custom_call.1} parent=67 // pred_fallthru
        _
      // Predicated region
      $region73: #{tpu_custom_call.1} parent=67 // pred_check
        %p769 = pneg %p266
      $region74: #{tpu_custom_call.1} parent=67 // pred_check_branch
        %771 = sbr.rel (%p769) target = $region76
      $region75: #{tpu_custom_call.1} parent=67 // pred_region
        %s772 = smul.u32 4, %s23
        %p773 = scmp.lt.s32.totalorder %s772, 7
        %s774 = scalar_select %p773, %s772, 7
        %s775 = smul.addr %s774, 8
        %s776 = scalar_lea.vmem %s10, %s775
      $region76: #{tpu_custom_call.1} parent=67 // pred_fallthru
        _
    $region68: #{tpu_custom_call.1} parent=5 // pred_fallthru
      _
  $region6: #{tpu_custom_call.1} parent=0 // loop_footer
    %s21 = sadd.s32 1, %s17
  $region7: #{tpu_custom_call.1} parent=0 // loop_footer_branch
    %16 = sbr.rel target = $region3
  $region8: #{tpu_custom_call.1} parent=0 // loop_exit
    _

// kernel: tpu_custom_call.1
$region0: #{tpu_custom_call.1}
  #allocation0 [shape = 'u32[]', space=smem, size = 0x4, offset = 0x4, fixed_abs, tag = 'smem constant byte address 0x4 - core index']
  #allocation1 [shape = 'u32[144,128]{1,0:T(1,128)}', space=vmem, size = 0x12000, scoped, tag = 'internal scratch']
  %s0 = inlined_call_operand.vmem [shape: bf16[64,16], index: 0, kind: input, shape index: {}]
  %s1 = inlined_call_operand.vmem [shape: bf16[16,32], index: 1, kind: input, shape index: {}]
  %s2 = inlined_call_operand.vmem [shape: f32[1,32], index: 2, kind: input, shape index: {}]
  %s3 = inlined_call_operand.vmem [shape: bf16[32,8], index: 3, kind: input, shape index: {}]
  %s4 = inlined_call_operand.vmem [shape: f32[1,8], index: 4, kind: input, shape index: {}]
  %s5 = inlined_call_operand.vmem [shape: bf16[8,32], index: 5, kind: input, shape index: {}]
  %s6 = inlined_call_operand.vmem [shape: f32[1,32], index: 6, kind: input, shape index: {}]
  %s7 = inlined_call_operand.vmem [shape: bf16[32,16], index: 7, kind: input, shape index: {}]
  %s8 = inlined_call_operand.vmem [shape: f32[1,16], index: 8, kind: input, shape index: {}]
  %s9 = inlined_call_operand.vmem [shape: f32[64,8], index: 9, kind: output, shape index: {0}]
  %s10 = inlined_call_operand.vmem [shape: f32[64,16], index: 10, kind: output, shape index: {1}]
  %11 = xla_tuple %s9, %s10
  %s12 = sld [smem:[#allocation0]]
  $region77: #{tpu_custom_call.1} parent=0
    _
  %s14 = ssub.s32 1, %s12
  %s15 = scalar_select 0, %s14, %s12
  loop: start=0, step=1, limit=4
  $region2: #{tpu_custom_call.1} parent=0 // loop_pre_header
    _
  $region3: #{tpu_custom_call.1} parent=0 // loop_header
    %s17 = sphi 0, %s21
    %p18 = scmp.ge.s32.totalorder %s17, 4
    %s27 = sphi 0, %s29
    %s30 = sphi 0, %s27
    %s31 = sphi 0, %s30
    %s47 = sphi 0, %s31
    %s51 = sphi 0, %s51
    %s53 = sphi 0, %s51
    %s54 = sphi 0, %s53
    %s68 = sphi 0, %s54
    %s72 = sphi 0, %s72
    %s74 = sphi 0, %s72
    %s75 = sphi 0, %s74
    %s89 = sphi 0, %s75
    %s93 = sphi 0, %s93
    %s95 = sphi 0, %s93
    %s96 = sphi 0, %s95
    %s110 = sphi 0, %s96
    %s114 = sphi 0, %s114
    %s116 = sphi 0, %s114
    %s117 = sphi 0, %s116
    %s131 = sphi 0, %s117
    %s135 = sphi 0, %s135
    %s137 = sphi 0, %s135
    %s138 = sphi 0, %s137
    %s152 = sphi 0, %s138
    %s156 = sphi 0, %s156
    %s158 = sphi 0, %s156
    %s159 = sphi 0, %s158
    %s173 = sphi 0, %s159
    %s177 = sphi 0, %s177
    %s179 = sphi 0, %s177
    %s180 = sphi 0, %s179
    %s194 = sphi 0, %s180
    %s198 = sphi 0, %s198
    %s200 = sphi 0, %s198
    %s201 = sphi 0, %s200
    %s215 = sphi 0, %s201
    %s221 = sphi 0, %s223
    %s224 = sphi 0, %s221
    %s225 = sphi 0, %s224
    %s241 = sphi 0, %s225
    %s247 = sphi 0, %s249
    %s250 = sphi 0, %s247
    %s251 = sphi 0, %s250
    %s267 = sphi 0, %s251
  $region4: #{tpu_custom_call.1} parent=0 // loop_header_branch
    %20 = sbr.rel (%p18) target = $region8
  $region5: #{tpu_custom_call.1} parent=0 // loop_body
    %s22 = ssub.s32 %s17, 1
    %s23 = ssub.s32 %s17, 2
    %s24 = sadd.s32 %s17, 1
    %s25 = ssub.s32 %s17, %s24
    %p26 = scmp.eq.s32.totalorder %s25, 0
    %s28 = sadd.s32 %s27, 1
    %s29 = scalar_select %p26, %s27, %s28
    %p32 = pneg %p26
    %p33 = scmp.eq.s32.totalorder %s17, 1
    %p34 = por %p32, %p33
    %p35 = scmp.ne.s32.totalorder %s27, %s30
    %p36 = scmp.eq.s32.totalorder %s17, 0
    %p37 = por %p35, %p36
    %p38 = scmp.ne.s32.totalorder %s27, %s30
    %p39 = scmp.eq.s32.totalorder %s22, 1
    %p40 = por %p38, %p39
    %p41 = scmp.ne.s32.totalorder %s30, %s31
    %p42 = scmp.eq.s32.totalorder %s22, 0
    %p43 = por %p41, %p42
    %p44 = scmp.ne.s32.totalorder %s30, %s31
    %p45 = scmp.eq.s32.totalorder %s23, 1
    %p46 = por %p44, %p45
    %p48 = scmp.ne.s32.totalorder %s31, %s47
    %p49 = scmp.eq.s32.totalorder %s23, 0
    %p50 = por %p48, %p49
    %s52 = sadd.s32 %s51, 1
    %p55 = scmp.eq.s32.totalorder %s17, 1
    %p56 = scmp.ne.s32.totalorder %s51, %s53
    %p57 = scmp.eq.s32.totalorder %s17, 0
    %p58 = por %p56, %p57
    %p59 = scmp.ne.s32.totalorder %s51, %s53
    %p60 = scmp.eq.s32.totalorder %s22, 1
    %p61 = por %p59, %p60
    %p62 = scmp.ne.s32.totalorder %s53, %s54
    %p63 = scmp.eq.s32.totalorder %s22, 0
    %p64 = por %p62, %p63
    %p65 = scmp.ne.s32.totalorder %s53, %s54
    %p66 = scmp.eq.s32.totalorder %s23, 1
    %p67 = por %p65, %p66
    %p69 = scmp.ne.s32.totalorder %s54, %s68
    %p70 = scmp.eq.s32.totalorder %s23, 0
    %p71 = por %p69, %p70
    %s73 = sadd.s32 %s72, 1
    %p76 = scmp.eq.s32.totalorder %s17, 1
    %p77 = scmp.ne.s32.totalorder %s72, %s74
    %p78 = scmp.eq.s32.totalorder %s17, 0
    %p79 = por %p77, %p78
    %p80 = scmp.ne.s32.totalorder %s72, %s74
    %p81 = scmp.eq.s32.totalorder %s22, 1
    %p82 = por %p80, %p81
    %p83 = scmp.ne.s32.totalorder %s74, %s75
    %p84 = scmp.eq.s32.totalorder %s22, 0
    %p85 = por %p83, %p84
    %p86 = scmp.ne.s32.totalorder %s74, %s75
    %p87 = scmp.eq.s32.totalorder %s23, 1
    %p88 = por %p86, %p87
    %p90 = scmp.ne.s32.totalorder %s75, %s89
    %p91 = scmp.eq.s32.totalorder %s23, 0
    %p92 = por %p90, %p91
    %s94 = sadd.s32 %s93, 1
    %p97 = scmp.eq.s32.totalorder %s17, 1
    %p98 = scmp.ne.s32.totalorder %s93, %s95
    %p99 = scmp.eq.s32.totalorder %s17, 0
    %p100 = por %p98, %p99
    %p101 = scmp.ne.s32.totalorder %s93, %s95
    %p102 = scmp.eq.s32.totalorder %s22, 1
    %p103 = por %p101, %p102
    %p104 = scmp.ne.s32.totalorder %s95, %s96
    %p105 = scmp.eq.s32.totalorder %s22, 0
    %p106 = por %p104, %p105
    %p107 = scmp.ne.s32.totalorder %s95, %s96
    %p108 = scmp.eq.s32.totalorder %s23, 1
    %p109 = por %p107, %p108
    %p111 = scmp.ne.s32.totalorder %s96, %s110
    %p112 = scmp.eq.s32.totalorder %s23, 0
    %p113 = por %p111, %p112
    %s115 = sadd.s32 %s114, 1
    %p118 = scmp.eq.s32.totalorder %s17, 1
    %p119 = scmp.ne.s32.totalorder %s114, %s116
    %p120 = scmp.eq.s32.totalorder %s17, 0
    %p121 = por %p119, %p120
    %p122 = scmp.ne.s32.totalorder %s114, %s116
    %p123 = scmp.eq.s32.totalorder %s22, 1
    %p124 = por %p122, %p123
    %p125 = scmp.ne.s32.totalorder %s116, %s117
    %p126 = scmp.eq.s32.totalorder %s22, 0
    %p127 = por %p125, %p126
    %p128 = scmp.ne.s32.totalorder %s116, %s117
    %p129 = scmp.eq.s32.totalorder %s23, 1
    %p130 = por %p128, %p129
    %p132 = scmp.ne.s32.totalorder %s117, %s131
    %p133 = scmp.eq.s32.totalorder %s23, 0
    %p134 = por %p132, %p133
    %s136 = sadd.s32 %s135, 1
    %p139 = scmp.eq.s32.totalorder %s17, 1
    %p140 = scmp.ne.s32.totalorder %s135, %s137
    %p141 = scmp.eq.s32.totalorder %s17, 0
    %p142 = por %p140, %p141
    %p143 = scmp.ne.s32.totalorder %s135, %s137
    %p144 = scmp.eq.s32.totalorder %s22, 1
    %p145 = por %p143, %p144
    %p146 = scmp.ne.s32.totalorder %s137, %s138
    %p147 = scmp.eq.s32.totalorder %s22, 0
    %p148 = por %p146, %p147
    %p149 = scmp.ne.s32.totalorder %s137, %s138
    %p150 = scmp.eq.s32.totalorder %s23, 1
    %p151 = por %p149, %p150
    %p153 = scmp.ne.s32.totalorder %s138, %s152
    %p154 = scmp.eq.s32.totalorder %s23, 0
    %p155 = por %p153, %p154
    %s157 = sadd.s32 %s156, 1
    %p160 = scmp.eq.s32.totalorder %s17, 1
    %p161 = scmp.ne.s32.totalorder %s156, %s158
    %p162 = scmp.eq.s32.totalorder %s17, 0
    %p163 = por %p161, %p162
    %p164 = scmp.ne.s32.totalorder %s156, %s158
    %p165 = scmp.eq.s32.totalorder %s22, 1
    %p166 = por %p164, %p165
    %p167 = scmp.ne.s32.totalorder %s158, %s159
    %p168 = scmp.eq.s32.totalorder %s22, 0
    %p169 = por %p167, %p168
    %p170 = scmp.ne.s32.totalorder %s158, %s159
    %p171 = scmp.eq.s32.totalorder %s23, 1
    %p172 = por %p170, %p171
    %p174 = scmp.ne.s32.totalorder %s159, %s173
    %p175 = scmp.eq.s32.totalorder %s23, 0
    %p176 = por %p174, %p175
    %s178 = sadd.s32 %s177, 1
    %p181 = scmp.eq.s32.totalorder %s17, 1
    %p182 = scmp.ne.s32.totalorder %s177, %s179
    %p183 = scmp.eq.s32.totalorder %s17, 0
    %p184 = por %p182, %p183
    %p185 = scmp.ne.s32.totalorder %s177, %s179
    %p186 = scmp.eq.s32.totalorder %s22, 1
    %p187 = por %p185, %p186
    %p188 = scmp.ne.s32.totalorder %s179, %s180
    %p189 = scmp.eq.s32.totalorder %s22, 0
    %p190 = por %p188, %p189
    %p191 = scmp.ne.s32.totalorder %s179, %s180
    %p192 = scmp.eq.s32.totalorder %s23, 1
    %p193 = por %p191, %p192
    %p195 = scmp.ne.s32.totalorder %s180, %s194
    %p196 = scmp.eq.s32.totalorder %s23, 0
    %p197 = por %p195, %p196
    %s199 = sadd.s32 %s198, 1
    %p202 = scmp.eq.s32.totalorder %s17, 1
    %p203 = scmp.ne.s32.totalorder %s198, %s200
    %p204 = scmp.eq.s32.totalorder %s17, 0
    %p205 = por %p203, %p204
    %p206 = scmp.ne.s32.totalorder %s198, %s200
    %p207 = scmp.eq.s32.totalorder %s22, 1
    %p208 = por %p206, %p207
    %p209 = scmp.ne.s32.totalorder %s200, %s201
    %p210 = scmp.eq.s32.totalorder %s22, 0
    %p211 = por %p209, %p210
    %p212 = scmp.ne.s32.totalorder %s200, %s201
    %p213 = scmp.eq.s32.totalorder %s23, 1
    %p214 = por %p212, %p213
    %p216 = scmp.ne.s32.totalorder %s201, %s215
    %p217 = scmp.eq.s32.totalorder %s23, 0
    %p218 = por %p216, %p217
    %s219 = ssub.s32 %s17, %s24
    %p220 = scmp.eq.s32.totalorder %s219, 0
    %s222 = sadd.s32 %s221, 1
    %s223 = scalar_select %p220, %s221, %s222
    %p226 = pneg %p220
    %p227 = scmp.eq.s32.totalorder %s17, 1
    %p228 = por %p226, %p227
    %p229 = scmp.ne.s32.totalorder %s221, %s224
    %p230 = scmp.eq.s32.totalorder %s17, 0
    %p231 = por %p229, %p230
    %p232 = scmp.ne.s32.totalorder %s221, %s224
    %p233 = scmp.eq.s32.totalorder %s22, 1
    %p234 = por %p232, %p233
    %p235 = scmp.ne.s32.totalorder %s224, %s225
    %p236 = scmp.eq.s32.totalorder %s22, 0
    %p237 = por %p235, %p236
    %p238 = scmp.ne.s32.totalorder %s224, %s225
    %p239 = scmp.eq.s32.totalorder %s23, 1
    %p240 = por %p238, %p239
    %p242 = scmp.ne.s32.totalorder %s225, %s241
    %p243 = scmp.eq.s32.totalorder %s23, 0
    %p244 = por %p242, %p243
    %s245 = ssub.s32 %s17, %s24
    %p246 = scmp.eq.s32.totalorder %s245, 0
    %s248 = sadd.s32 %s247, 1
    %s249 = scalar_select %p246, %s247, %s248
    %p252 = pneg %p246
    %p253 = scmp.eq.s32.totalorder %s17, 1
    %p254 = por %p252, %p253
    %p255 = scmp.ne.s32.totalorder %s247, %s250
    %p256 = scmp.eq.s32.totalorder %s17, 0
    %p257 = por %p255, %p256
    %p258 = scmp.ne.s32.totalorder %s247, %s250
    %p259 = scmp.eq.s32.totalorder %s22, 1
    %p260 = por %p258, %p259
    %p261 = scmp.ne.s32.totalorder %s250, %s251
    %p262 = scmp.eq.s32.totalorder %s22, 0
    %p263 = por %p261, %p262
    %p264 = scmp.ne.s32.totalorder %s250, %s251
    %p265 = scmp.eq.s32.totalorder %s23, 1
    %p266 = por %p264, %p265
    %p268 = scmp.ne.s32.totalorder %s251, %s267
    %p269 = scmp.eq.s32.totalorder %s23, 0
    %p270 = por %p268, %p269
    %p271 = scmp.le.s32.totalorder 1, %s17
    %p272 = scmp.lt.s32.totalorder %s17, 3
    %p273 = pnand %p271, %p272
    %p274 = pneg %p273
    // Predicated region
    $region9: #{tpu_custom_call.1} parent=5 // pred_check
      _
    $region10: #{tpu_custom_call.1} parent=5 // pred_check_branch
      %276 = sbr.rel (%p273) target = $region12
    $region11: #{tpu_custom_call.1} parent=5 // pred_region
      %s277 = ssub.s32 %s17, 1
      // Predicated region
      $region13: #{tpu_custom_call.1} parent=11 // pred_check
        %p278 = pneg %p64
      $region14: #{tpu_custom_call.1} parent=11 // pred_check_branch
        %280 = sbr.rel (%p278) target = $region16
      $region15: #{tpu_custom_call.1} parent=11 // pred_region
        _
      $region16: #{tpu_custom_call.1} parent=11 // pred_fallthru
        _
      // Predicated region
      $region17: #{tpu_custom_call.1} parent=11 // pred_check
        %p281 = pneg %p85
      $region18: #{tpu_custom_call.1} parent=11 // pred_check_branch
        %283 = sbr.rel (%p281) target = $region20
      $region19: #{tpu_custom_call.1} parent=11 // pred_region
        _
      $region20: #{tpu_custom_call.1} parent=11 // pred_fallthru
        _
      // Predicated region
      $region21: #{tpu_custom_call.1} parent=11 // pred_check
        %p284 = pneg %p106
      $region22: #{tpu_custom_call.1} parent=11 // pred_check_branch
        %286 = sbr.rel (%p284) target = $region24
      $region23: #{tpu_custom_call.1} parent=11 // pred_region
        _
      $region24: #{tpu_custom_call.1} parent=11 // pred_fallthru
        _
      // Predicated region
      $region25: #{tpu_custom_call.1} parent=11 // pred_check
        %p287 = pneg %p127
      $region26: #{tpu_custom_call.1} parent=11 // pred_check_branch
        %289 = sbr.rel (%p287) target = $region28
      $region27: #{tpu_custom_call.1} parent=11 // pred_region
        _
      $region28: #{tpu_custom_call.1} parent=11 // pred_fallthru
        _
      // Predicated region
      $region29: #{tpu_custom_call.1} parent=11 // pred_check
        %p290 = pneg %p148
      $region30: #{tpu_custom_call.1} parent=11 // pred_check_branch
        %292 = sbr.rel (%p290) target = $region32
      $region31: #{tpu_custom_call.1} parent=11 // pred_region
        _
      $region32: #{tpu_custom_call.1} parent=11 // pred_fallthru
        _
      // Predicated region
      $region33: #{tpu_custom_call.1} parent=11 // pred_check
        %p293 = pneg %p169
      $region34: #{tpu_custom_call.1} parent=11 // pred_check_branch
        %295 = sbr.rel (%p293) target = $region36
      $region35: #{tpu_custom_call.1} parent=11 // pred_region
        _
      $region36: #{tpu_custom_call.1} parent=11 // pred_fallthru
        _
      // Predicated region
      $region37: #{tpu_custom_call.1} parent=11 // pred_check
        %p296 = pneg %p190
      $region38: #{tpu_custom_call.1} parent=11 // pred_check_branch
        %298 = sbr.rel (%p296) target = $region40
      $region39: #{tpu_custom_call.1} parent=11 // pred_region
        _
      $region40: #{tpu_custom_call.1} parent=11 // pred_fallthru
        _
      // Predicated region
      $region41: #{tpu_custom_call.1} parent=11 // pred_check
        %p299 = pneg %p211
      $region42: #{tpu_custom_call.1} parent=11 // pred_check_branch
        %301 = sbr.rel (%p299) target = $region44
      $region43: #{tpu_custom_call.1} parent=11 // pred_region
        _
      $region44: #{tpu_custom_call.1} parent=11 // pred_fallthru
        _
    $region12: #{tpu_custom_call.1} parent=5 // pred_fallthru
      _
    %p302 = scmp.lt.s32.totalorder %s17, 2
    // Predicated region
    $region45: #{tpu_custom_call.1} parent=5 // pred_check
      %p303 = pneg %p302
    $region46: #{tpu_custom_call.1} parent=5 // pred_check_branch
      %305 = sbr.rel (%p303) target = $region48
    $region47: #{tpu_custom_call.1} parent=5 // pred_region
      // Predicated region
      $region49: #{tpu_custom_call.1} parent=47 // pred_check
        %p306 = pneg %p37
      $region50: #{tpu_custom_call.1} parent=47 // pred_check_branch
        %308 = sbr.rel (%p306) target = $region52
      $region51: #{tpu_custom_call.1} parent=47 // pred_region
        %s309 = smul.u32 4, %s17
        %p310 = scmp.lt.s32.totalorder %s309, 7
        %s311 = scalar_select %p310, %s309, 7
        %s312 = smul.addr %s311, 4
        %s313 = scalar_lea.vmem %s0, %s312
        %s314 = smul.u32 4, %s17
      $region52: #{tpu_custom_call.1} parent=47 // pred_fallthru
        _
    $region48: #{tpu_custom_call.1} parent=5 // pred_fallthru
      _
    %p315 = scmp.le.s32.totalorder 1, %s17
    %p316 = scmp.lt.s32.totalorder %s17, 3
    %p317 = pnand %p315, %p316
    %p318 = pneg %p317
    // Predicated region
    $region53: #{tpu_custom_call.1} parent=5 // pred_check
      _
    $region54: #{tpu_custom_call.1} parent=5 // pred_check_branch
      %320 = sbr.rel (%p317) target = $region56
    $region55: #{tpu_custom_call.1} parent=5 // pred_region
      %s321 = ssub.s32 %s17, 1
      %s322 = smul.u32 4, %s22
      %p323 = scmp.lt.s32.totalorder %s322, 7
      %s324 = scalar_select %p323, %s322, 7
      %s325 = smul.addr %s324, 4
      %s326 = scalar_lea.vmem %s0, %s325
      %p327 = pneg %p43
      %p328 = pneg %p40
      %p329 = pneg %p64
      %p330 = pneg %p61
      %p331 = pneg %p85
      %p332 = pneg %p82
      %p333 = pneg %p106
      %p334 = pneg %p103
      %p335 = pneg %p127
      %p336 = pneg %p124
      %p337 = pneg %p148
      %p338 = pneg %p145
      %p339 = pneg %p169
      %p340 = pneg %p166
      %p341 = pneg %p190
      %p342 = pneg %p187
      %p343 = pneg %p211
      %p344 = pneg %p208
      %p345 = pneg %p237
      %p346 = pneg %p234
      %s347 = smul.u32 4, %s22
      %p348 = scmp.lt.s32.totalorder %s347, 7
      %s349 = scalar_select %p348, %s347, 7
      %s350 = smul.addr %s349, 8
      %s351 = scalar_lea.vmem %s9, %s350
      %p352 = pneg %p263
      %p353 = pneg %p260
      %s354 = smul.u32 4, %s22
      %p355 = scmp.lt.s32.totalorder %s354, 7
      %s356 = scalar_select %p355, %s354, 7
      %s357 = smul.addr %s356, 8
      %s358 = scalar_lea.vmem %s10, %s357
      %s359 = smul.u32 4, %s22
      %p360 = scmp.lt.s32.totalorder %s359, 7
      %s361 = scalar_select %p360, %s359, 7
      %s362 = smul.addr %s361, 4
      %s363 = scalar_lea.vmem %s0, %s362
      %s364 = smul.u32 4, %s22
      %s365 = smul.u32 4, %s22
      %p366 = scmp.lt.s32.totalorder %s365, 7
      %s367 = scalar_select %p366, %s365, 7
      %s368 = smul.addr %s367, 8
      %s369 = scalar_lea.vmem %s9, %s368
      %s370 = smul.u32 4, %s22
      %s371 = smul.u32 4, %s22
      %p372 = scmp.lt.s32.totalorder %s371, 7
      %s373 = scalar_select %p372, %s371, 7
      %s374 = smul.addr %s373, 8
      %s375 = scalar_lea.vmem %s10, %s374
      %s376 = smul.u32 4, %s22
      %v378 = vld [vmem:[%s363] sm:$0xf]
      %v379 = vld [vmem:[%s363 + $0x4] sm:$0xf]
      %v380 = vld [vmem:[%s363 + $0x8] sm:$0xf]
      %v381 = vld [vmem:[%s363 + $0xc] sm:$0xf]
      %v382 = vld [vmem:[%s1] sm:$0xf]
      %v383 = vld [vmem:[%s1 + $0x4] sm:$0xf]
      %v384 = vld [vmem:[%s2] sm:$0x1]
      %v386 = vlaneseq
      %v387 = vshrl.u32 %v386, 7
      %v388 = vsub.s32 0, %v387
      %v389 = vrot.slane %v384, %v388
      %v395 = vunpack.c.l.b16 %v378
      %v396 = vunpack.c.l.b16 %v379
      %v397 = vunpack.c.l.b16 %v380
      %v398 = vunpack.c.l.b16 %v381
      %v399 = vpack.c.b16 %v396, %v395
      %v400 = vpack.c.b16 %v398, %v397
      %v403 = vunpack.c.l.b16 %v382
      %v404 = vunpack.c.l.b16 %v383
      %v405 = vpack.c.b16 %v404, %v403
      %vm407 = vcmask 130048
      %v409 = vsel %vm407, %v399, 0
      %v412 = vsel %vm407, %v400, 0
      %414 = vmatprep.subr.bf16.mxu0 0
      %415 = vmatpush1.bf16.msra.mxu0 %v405
      %416 = vmatprep.subr.bf16.mxu0 0
      %417 = vmatpush1.bf16.msra.mxu0 0
      %418 = vmatprep.subr.bf16.mxu0 0
      %419 = vmatpush1.bf16.msra.mxu0 0
      %420 = vmatprep.subr.bf16.mxu0 0
      %421 = vmatpush1.bf16.msra.mxu0 0
      %422 = vmatprep.subr.bf16.mxu0 0
      %423 = vmatpush1.bf16.msra.mxu0 0
      %424 = vmatprep.subr.bf16.mxu0 0
      %425 = vmatpush1.bf16.msra.mxu0 0
      %426 = vmatprep.subr.bf16.mxu0 0
      %427 = vmatpush1.bf16.msra.mxu0 0
      %428 = vmatprep.subr.bf16.mxu0 0
      %429 = vmatpush1.bf16.msra.mxu0 0
      %430 = vmatprep.subr.bf16.mxu0 0
      %431 = vmatpush1.bf16.msra.mxu0 0
      %432 = vmatprep.subr.bf16.mxu0 0
      %433 = vmatpush1.bf16.msra.mxu0 0
      %434 = vmatprep.subr.bf16.mxu0 0
      %435 = vmatpush1.bf16.msra.mxu0 0
      %436 = vmatprep.subr.bf16.mxu0 0
      %437 = vmatpush1.bf16.msra.mxu0 0
      %438 = vmatprep.subr.bf16.mxu0 0
      %439 = vmatpush1.bf16.msra.mxu0 0
      %440 = vmatprep.subr.bf16.mxu0 0
      %441 = vmatpush1.bf16.msra.mxu0 0
      %442 = vmatprep.subr.bf16.mxu0 0
      %443 = vmatpush1.bf16.msra.mxu0 0
      %444 = vmatprep.subr.bf16.mxu0 0
      %445 = vmatpush1.bf16.msra.mxu0 0
      %446 = vmatprep.mubr.bf16.mxu0 0
      %447 = vmatmul.mubr.bf16.gmra.mrb[0].mxu0 %v409
      %v448 = vpop.f32.mrb[0].mxu0
      %v449 = vadd.f32 %v389, %v448
      %v450 = vpop.f32.mrb[0].mxu0
      %v451 = vpop.f32.mrb[0].mxu0
      %v452 = vadd.f32 %v389, %v451
      %v453 = vpop.f32.mrb[0].mxu0
      %454 = vmatprep.mubr.bf16.mxu0 0
      %455 = vmatmul.mubr.bf16.gmra.mrb[0].mxu0 %v412
      %v456 = vpop.f32.mrb[0].mxu0
      %v457 = vadd.f32 %v389, %v456
      %v458 = vpop.f32.mrb[0].mxu0
      %v459 = vpop.f32.mrb[0].mxu0
      %v460 = vadd.f32 %v389, %v459
      %v461 = vpop.f32.mrb[0].mxu0
      %462 = vdwg.mxu0
      %v463 = vmax.f32 %v449, 0.0
      %v464 = vmax.f32 %v452, 0.0
      %v465 = vmax.f32 %v457, 0.0
      %v466 = vmax.f32 %v460, 0.0
      %v467 = vpack.c.bf16 %v464, %v463
      %v468 = vpack.c.bf16 %v466, %v465
      %v469 = vld [vmem:[%s3] sm:$0xf]
      %v470 = vld [vmem:[%s3 + $0x4] sm:$0xf]
      %v471 = vld [vmem:[%s3 + $0x8] sm:$0xf]
      %v472 = vld [vmem:[%s3 + $0xc] sm:$0xf]
      %v473 = vld [vmem:[%s4] sm:$0x1]
      %v475 = vlaneseq
      %v476 = vshrl.u32 %v475, 7
      %v477 = vsub.s32 0, %v476
      %v478 = vrot.slane %v473, %v477
      %v484 = vunpack.c.l.b16 %v469
      %v485 = vunpack.c.l.b16 %v470
      %v486 = vunpack.c.l.b16 %v471
      %v487 = vunpack.c.l.b16 %v472
      %v488 = vpack.c.b16 %v485, %v484
      %v489 = vpack.c.b16 %v487, %v486
      %vm492 = vcmask 261120
      %v494 = vsel %vm492, %v467, 0
      %v497 = vsel %vm492, %v468, 0
      %499 = vmatprep.subr.bf16.mxu0 0
      %500 = vmatpush1.bf16.msra.mxu0 %v488
      %501 = vmatprep.subr.bf16.mxu0 0
      %502 = vmatpush1.bf16.msra.mxu0 %v489
      %503 = vmatprep.subr.bf16.mxu0 0
      %504 = vmatpush1.bf16.msra.mxu0 0
      %505 = vmatprep.subr.bf16.mxu0 0
      %506 = vmatpush1.bf16.msra.mxu0 0
      %507 = vmatprep.subr.bf16.mxu0 0
      %508 = vmatpush1.bf16.msra.mxu0 0
      %509 = vmatprep.subr.bf16.mxu0 0
      %510 = vmatpush1.bf16.msra.mxu0 0
      %511 = vmatprep.subr.bf16.mxu0 0
      %512 = vmatpush1.bf16.msra.mxu0 0
      %513 = vmatprep.subr.bf16.mxu0 0
      %514 = vmatpush1.bf16.msra.mxu0 0
      %515 = vmatprep.subr.bf16.mxu0 0
      %516 = vmatpush1.bf16.msra.mxu0 0
      %517 = vmatprep.subr.bf16.mxu0 0
      %518 = vmatpush1.bf16.msra.mxu0 0
      %519 = vmatprep.subr.bf16.mxu0 0
      %520 = vmatpush1.bf16.msra.mxu0 0
      %521 = vmatprep.subr.bf16.mxu0 0
      %522 = vmatpush1.bf16.msra.mxu0 0
      %523 = vmatprep.subr.bf16.mxu0 0
      %524 = vmatpush1.bf16.msra.mxu0 0
      %525 = vmatprep.subr.bf16.mxu0 0
      %526 = vmatpush1.bf16.msra.mxu0 0
      %527 = vmatprep.subr.bf16.mxu0 0
      %528 = vmatpush1.bf16.msra.mxu0 0
      %529 = vmatprep.subr.bf16.mxu0 0
      %530 = vmatpush1.bf16.msra.mxu0 0
      %531 = vmatprep.mubr.bf16.mxu0 0
      %532 = vmatmul.mubr.bf16.gmra.mrb[0].mxu0 %v494
      %v533 = vpop.f32.mrb[0].mxu0
      %v534 = vadd.f32 %v478, %v533
      %v535 = vpop.f32.mrb[0].mxu0
      %v536 = vpop.f32.mrb[0].mxu0
      %v537 = vadd.f32 %v478, %v536
      %v538 = vpop.f32.mrb[0].mxu0
      %539 = vmatprep.mubr.bf16.mxu0 0
      %540 = vmatmul.mubr.bf16.gmra.mrb[0].mxu0 %v497
      %v541 = vpop.f32.mrb[0].mxu0
      %v542 = vadd.f32 %v478, %v541
      %v543 = vpop.f32.mrb[0].mxu0
      %v544 = vpop.f32.mrb[0].mxu0
      %v545 = vadd.f32 %v478, %v544
      %v546 = vpop.f32.mrb[0].mxu0
      %547 = vdwg.mxu0
      %v548 = vmax.f32 %v534, 0.0
      %v549 = vmax.f32 %v537, 0.0
      %v550 = vmax.f32 %v542, 0.0
      %v551 = vmax.f32 %v545, 0.0
      %vm552 = vcmask 64512
      %553 = vst.msk [vmem:[%s369] sm:$0xff] %vm552, %v548
      %554 = vst.msk [vmem:[%s369 + $0x8] sm:$0xff] %vm552, %v549
      %555 = vst.msk [vmem:[%s369 + $0x10] sm:$0xff] %vm552, %v550
      %556 = vst.msk [vmem:[%s369 + $0x18] sm:$0xff] %vm552, %v551
      %v557 = vpack.c.bf16 %v549, %v548
      %v558 = vpack.c.bf16 %v551, %v550
      %v559 = vld [vmem:[%s5] sm:$0xf]
      %v560 = vld [vmem:[%s6] sm:$0x1]
      %v562 = vlaneseq
      %v563 = vshrl.u32 %v562, 7
      %v564 = vsub.s32 0, %v563
      %v565 = vrot.slane %v560, %v564
      %v568 = vsel %vm552, %v557, 0
      %v571 = vsel %vm552, %v558, 0
      %vm573 = vcmask 1043456
      %v575 = vsel %vm573, %v559, 0
      %577 = vmatprep.subr.bf16.mxu0 0
      %578 = vmatpush1.bf16.msra.mxu0 %v575
      %579 = vmatprep.subr.bf16.mxu0 0
      %580 = vmatpush1.bf16.msra.mxu0 0
      %581 = vmatprep.subr.bf16.mxu0 0
      %582 = vmatpush1.bf16.msra.mxu0 0
      %583 = vmatprep.subr.bf16.mxu0 0
      %584 = vmatpush1.bf16.msra.mxu0 0
      %585 = vmatprep.subr.bf16.mxu0 0
      %586 = vmatpush1.bf16.msra.mxu0 0
      %587 = vmatprep.subr.bf16.mxu0 0
      %588 = vmatpush1.bf16.msra.mxu0 0
      %589 = vmatprep.subr.bf16.mxu0 0
      %590 = vmatpush1.bf16.msra.mxu0 0
      %591 = vmatprep.subr.bf16.mxu0 0
      %592 = vmatpush1.bf16.msra.mxu0 0
      %593 = vmatprep.subr.bf16.mxu0 0
      %594 = vmatpush1.bf16.msra.mxu0 0
      %595 = vmatprep.subr.bf16.mxu0 0
      %596 = vmatpush1.bf16.msra.mxu0 0
      %597 = vmatprep.subr.bf16.mxu0 0
      %598 = vmatpush1.bf16.msra.mxu0 0
      %599 = vmatprep.subr.bf16.mxu0 0
      %600 = vmatpush1.bf16.msra.mxu0 0
      %601 = vmatprep.subr.bf16.mxu0 0
      %602 = vmatpush1.bf16.msra.mxu0 0
      %603 = vmatprep.subr.bf16.mxu0 0
      %604 = vmatpush1.bf16.msra.mxu0 0
      %605 = vmatprep.subr.bf16.mxu0 0
      %606 = vmatpush1.bf16.msra.mxu0 0
      %607 = vmatprep.subr.bf16.mxu0 0
      %608 = vmatpush1.bf16.msra.mxu0 0
      %609 = vmatprep.mubr.bf16.mxu0 0
      %610 = vmatmul.mubr.bf16.gmra.mrb[0].mxu0 %v568
      %v611 = vpop.f32.mrb[0].mxu0
      %v612 = vadd.f32 %v565, %v611
      %v613 = vpop.f32.mrb[0].mxu0
      %v614 = vpop.f32.mrb[0].mxu0
      %v615 = vadd.f32 %v565, %v614
      %v616 = vpop.f32.mrb[0].mxu0
      %617 = vmatprep.mubr.bf16.mxu0 0
      %618 = vmatmul.mubr.bf16.gmra.mrb[0].mxu0 %v571
      %v619 = vpop.f32.mrb[0].mxu0
      %v620 = vadd.f32 %v565, %v619
      %v621 = vpop.f32.mrb[0].mxu0
      %v622 = vpop.f32.mrb[0].mxu0
      %v623 = vadd.f32 %v565, %v622
      %v624 = vpop.f32.mrb[0].mxu0
      %625 = vdwg.mxu0
      %v626 = vmax.f32 %v612, 0.0
      %v627 = vmax.f32 %v615, 0.0
      %v628 = vmax.f32 %v620, 0.0
      %v629 = vmax.f32 %v623, 0.0
      %v630 = vpack.c.bf16 %v627, %v626
      %v631 = vpack.c.bf16 %v629, %v628
      %v632 = vld [vmem:[%s7] sm:$0xf]
      %v633 = vld [vmem:[%s7 + $0x4] sm:$0xf]
      %v634 = vld [vmem:[%s7 + $0x8] sm:$0xf]
      %v635 = vld [vmem:[%s7 + $0xc] sm:$0xf]
      %v636 = vld [vmem:[%s8] sm:$0x1]
      %v638 = vlaneseq
      %v639 = vshrl.u32 %v638, 7
      %v640 = vsub.s32 0, %v639
      %v641 = vrot.slane %v636, %v640
      %v647 = vunpack.c.l.b16 %v632
      %v648 = vunpack.c.l.b16 %v633
      %v649 = vunpack.c.l.b16 %v634
      %v650 = vunpack.c.l.b16 %v635
      %v651 = vpack.c.b16 %v648, %v647
      %v652 = vpack.c.b16 %v650, %v649
      %v656 = vsel %vm492, %v630, 0
      %v659 = vsel %vm492, %v631, 0
      %661 = vmatprep.subr.bf16.mxu0 0
      %662 = vmatpush1.bf16.msra.mxu0 %v651
      %663 = vmatprep.subr.bf16.mxu0 0
      %664 = vmatpush1.bf16.msra.mxu0 %v652
      %665 = vmatprep.subr.bf16.mxu0 0
      %666 = vmatpush1.bf16.msra.mxu0 0
      %667 = vmatprep.subr.bf16.mxu0 0
      %668 = vmatpush1.bf16.msra.mxu0 0
      %669 = vmatprep.subr.bf16.mxu0 0
      %670 = vmatpush1.bf16.msra.mxu0 0
      %671 = vmatprep.subr.bf16.mxu0 0
      %672 = vmatpush1.bf16.msra.mxu0 0
      %673 = vmatprep.subr.bf16.mxu0 0
      %674 = vmatpush1.bf16.msra.mxu0 0
      %675 = vmatprep.subr.bf16.mxu0 0
      %676 = vmatpush1.bf16.msra.mxu0 0
      %677 = vmatprep.subr.bf16.mxu0 0
      %678 = vmatpush1.bf16.msra.mxu0 0
      %679 = vmatprep.subr.bf16.mxu0 0
      %680 = vmatpush1.bf16.msra.mxu0 0
      %681 = vmatprep.subr.bf16.mxu0 0
      %682 = vmatpush1.bf16.msra.mxu0 0
      %683 = vmatprep.subr.bf16.mxu0 0
      %684 = vmatpush1.bf16.msra.mxu0 0
      %685 = vmatprep.subr.bf16.mxu0 0
      %686 = vmatpush1.bf16.msra.mxu0 0
      %687 = vmatprep.subr.bf16.mxu0 0
      %688 = vmatpush1.bf16.msra.mxu0 0
      %689 = vmatprep.subr.bf16.mxu0 0
      %690 = vmatpush1.bf16.msra.mxu0 0
      %691 = vmatprep.subr.bf16.mxu0 0
      %692 = vmatpush1.bf16.msra.mxu0 0
      %693 = vmatprep.mubr.bf16.mxu0 0
      %694 = vmatmul.mubr.bf16.gmra.mrb[0].mxu0 %v656
      %v695 = vpop.f32.mrb[0].mxu0
      %v696 = vadd.f32 %v641, %v695
      %v697 = vpop.f32.mrb[0].mxu0
      %v698 = vpop.f32.mrb[0].mxu0
      %v699 = vadd.f32 %v641, %v698
      %v700 = vpop.f32.mrb[0].mxu0
      %701 = vmatprep.mubr.bf16.mxu0 0
      %702 = vmatmul.mubr.bf16.gmra.mrb[0].mxu0 %v659
      %v703 = vpop.f32.mrb[0].mxu0
      %v704 = vadd.f32 %v641, %v703
      %v705 = vpop.f32.mrb[0].mxu0
      %v706 = vpop.f32.mrb[0].mxu0
      %v707 = vadd.f32 %v641, %v706
      %v708 = vpop.f32.mrb[0].mxu0
      %709 = vdwg.mxu0
      %v710 = vxor.u32 %v696, 2147483648
      %v711 = vxor.u32 %v699, 2147483648
      %v712 = vxor.u32 %v704, 2147483648
      %v713 = vxor.u32 %v707, 2147483648
      %v714 = vmul.f32 %v710, 1.442695
      %v715 = vpow.pop %v714
      %v716 = vmul.f32 %v711, 1.442695
      %v717 = vpow.pop %v716
      %v718 = vmul.f32 %v712, 1.442695
      %v719 = vpow.pop %v718
      %v720 = vmul.f32 %v713, 1.442695
      %v721 = vpow.pop %v720
      %v722 = vadd.f32 %v715, 1.0
      %v723 = vadd.f32 %v717, 1.0
      %v724 = vadd.f32 %v719, 1.0
      %v725 = vadd.f32 %v721, 1.0
      %v726 = vrcp.pop %v722
      %v727 = vmul.f32 1.0, %v726
      %v728 = vrcp.pop %v723
      %v729 = vmul.f32 1.0, %v728
      %v730 = vrcp.pop %v724
      %v731 = vmul.f32 1.0, %v730
      %v732 = vrcp.pop %v725
      %v733 = vmul.f32 1.0, %v732
      %734 = vst.msk [vmem:[%s375] sm:$0xff] %vm407, %v727
      %735 = vst.msk [vmem:[%s375 + $0x8] sm:$0xff] %vm407, %v729
      %736 = vst.msk [vmem:[%s375 + $0x10] sm:$0xff] %vm407, %v731
      %737 = vst.msk [vmem:[%s375 + $0x18] sm:$0xff] %vm407, %v733
      %s738 = smul.u32 4, %s22
      %p739 = scmp.lt.s32.totalorder %s738, 7
      %s740 = scalar_select %p739, %s738, 7
      %s741 = smul.addr %s740, 8
      %s742 = scalar_lea.vmem %s9, %s741
      %s743 = smul.u32 4, %s22
      %p744 = scmp.lt.s32.totalorder %s743, 7
      %s745 = scalar_select %p744, %s743, 7
      %s746 = smul.addr %s745, 8
      %s747 = scalar_lea.vmem %s10, %s746
      // Predicated region
      $region57: #{tpu_custom_call.1} parent=55 // pred_check
        %p748 = pneg %p234
      $region58: #{tpu_custom_call.1} parent=55 // pred_check_branch
        %750 = sbr.rel (%p748) target = $region60
      $region59: #{tpu_custom_call.1} parent=55 // pred_region
        %s751 = smul.u32 4, %s22
      $region60: #{tpu_custom_call.1} parent=55 // pred_fallthru
        _
      // Predicated region
      $region61: #{tpu_custom_call.1} parent=55 // pred_check
        %p752 = pneg %p260
      $region62: #{tpu_custom_call.1} parent=55 // pred_check_branch
        %754 = sbr.rel (%p752) target = $region64
      $region63: #{tpu_custom_call.1} parent=55 // pred_region
        %s755 = smul.u32 4, %s22
      $region64: #{tpu_custom_call.1} parent=55 // pred_fallthru
        _
    $region56: #{tpu_custom_call.1} parent=5 // pred_fallthru
      _
    %p756 = scmp.le.s32.totalorder 2, %s17
    // Predicated region
    $region65: #{tpu_custom_call.1} parent=5 // pred_check
      %p757 = pneg %p756
    $region66: #{tpu_custom_call.1} parent=5 // pred_check_branch
      %759 = sbr.rel (%p757) target = $region68
    $region67: #{tpu_custom_call.1} parent=5 // pred_region
      %s760 = ssub.s32 %s17, 2
      // Predicated region
      $region69: #{tpu_custom_call.1} parent=67 // pred_check
        %p761 = pneg %p240
      $region70: #{tpu_custom_call.1} parent=67 // pred_check_branch
        %763 = sbr.rel (%p761) target = $region72
      $region71: #{tpu_custom_call.1} parent=67 // pred_region
        %s764 = smul.u32 4, %s23
        %p765 = scmp.lt.s32.totalorder %s764, 7
        %s766 = scalar_select %p765, %s764, 7
        %s767 = smul.addr %s766, 8
        %s768 = scalar_lea.vmem %s9, %s767
      $region72: #{tpu_custom_call.1} parent=67 // pred_fallthru
        _
      // Predicated region
      $region73: #{tpu_custom_call.1} parent=67 // pred_check
        %p769 = pneg %p266
      $region74: #{tpu_custom_call.1} parent=67 // pred_check_branch
        %771 = sbr.rel (%p769) target = $region76
      $region75: #{tpu_custom_call.1} parent=67 // pred_region
        %s772 = smul.u32 4, %s23
        %p773 = scmp.lt.s32.totalorder %s772, 7
        %s774 = scalar_select %p773, %s772, 7
        %s775 = smul.addr %s774, 8
        %s776 = scalar_lea.vmem %s10, %s775
      $region76: #{tpu_custom_call.1} parent=67 // pred_fallthru
        _
    $region68: #{tpu_custom_call.1} parent=5 // pred_fallthru
      _
  $region6: #{tpu_custom_call.1} parent=0 // loop_footer
    %s21 = sadd.s32 1, %s17
  $region7: #{tpu_custom_call.1} parent=0 // loop_footer_branch
    %16 = sbr.rel target = $region3
  $region8: #{tpu_custom_call.1} parent=0 // loop_exit
    _

</llo_original>
